<compile_context>
chip_gen: v7x
topology: tpu7x:2x2x1
jax: 0.10.0
libtpu: 0.0.40
codegen_flags: <defaults>
</compile_context>

<pallas_src>
import functools

import jax
import jax.numpy as jnp
import numpy as np
from jax import lax
from jax.experimental import pallas as pl
from jax.experimental.pallas import tpu as pltpu

DT = 0.1                      # ODE step size of the serial (step) layers
OUT_PAD = 128                 # lane-dense padded width of the final Linear output
COMPUTE_DTYPE = jnp.bfloat16  # MXU operand dtype (accumulation stays f32)


# ----------------------------------------------------------------------------
# Fused forward kernel: open conv + NSTEPS residual step convs + linear head.
# Activation layout: (batch_tile, H, lanes) with lanes = W*C (= 128 here) on the
# lane axis; the padded scratch adds two zero halo rows on the sublane axis only.
# ----------------------------------------------------------------------------
def _serialnet_kernel(x_ref, wopen_ref, bopen_ref, wstep_ref, bstep_ref,
                      wclose_ref, bclose_ref, out_ref,
                      actpad_ref, cur_ref, *, n_tile, H, lanes, nsteps, dt):
    # Zero only the vertical halo rows (the interior is fully overwritten every
    # layer, and the horizontal padding is folded into the band weights).
    zrow = jnp.zeros((n_tile, 1, lanes), dtype=actpad_ref.dtype)
    actpad_ref[:, 0:1, :] = zrow
    actpad_ref[:, H + 1:H + 2, :] = zrow

    def im2col():
        # (n_tile, H+2, lanes) padded bf16 -> (n_tile*H, 3*lanes) im2col matrix.
        cols = jnp.concatenate([actpad_ref[:, kh:kh + H, :] for kh in range(3)],
                               axis=-1)
        return cols.reshape(n_tile * H, 3 * lanes)

    def conv3x3(wband, brow):
        # ONE MXU matmul per conv (kh folded into K); bias + ReLU epilogue in f32.
        d = jnp.dot(im2col(), wband, preferred_element_type=jnp.float32)
        return jnp.maximum(d + brow, 0.0)                  # (n_tile*H, lanes) f32

    # ---- open_nn: Conv3x3(cin -> C) + bias + ReLU ----
    actpad_ref[:, 1:1 + H, :] = x_ref[...]                 # x pre-padded/bf16 in wrapper
    y = conv3x3(wopen_ref[...], bopen_ref[...])
    cur_ref[...] = y.reshape(n_tile, H, lanes)             # f32 residual state

    # ---- serial_nn: nsteps x (x <- x + dt * ReLU(Conv3x3(C -> C) + bias)) ----
    def step(s, carry):
        # single bf16 cast per layer into the shared padded scratch
        actpad_ref[:, 1:1 + H, :] = cur_ref[...].astype(actpad_ref.dtype)
        z = conv3x3(wstep_ref[s], bstep_ref[s])
        cur_ref[...] = cur_ref[...] + dt * z.reshape(n_tile, H, lanes)
        return carry

    lax.fori_loop(0, nsteps, step, 0, unroll=True)

    # ---- close_nn: flatten (torch NCHW order folded into the weight) + Linear,
    #      as ONE lane-dense matmul with a 128-wide padded class dim. ----
    flat = jnp.concatenate([cur_ref[:, h, :] for h in range(H)], axis=-1)
    out_ref[...] = (jnp.dot(flat.astype(wclose_ref.dtype), wclose_ref[...],
                            preferred_element_type=jnp.float32)
                    + bclose_ref[...]).astype(out_ref.dtype)


# ----------------------------------------------------------------------------
# One-time parameter preparation (hoisted out of the forward).
# ----------------------------------------------------------------------------
def prepare_params(params, *, H, W, compute_dtype=COMPUTE_DTYPE):
    C = params["open_w"].shape[0]
    cin = params["open_w"].shape[1]
    lanes = W * C
    # TODO(synk): generalize to W*C not a multiple of 128 by padding the channel dim.
    assert lanes % 128 == 0, "W*C must be lane-aligned (multiple of 128)"
    assert W * cin <= lanes

    def conv_band(w_oihw, b):
        """Band weight folding (kw, ci) AND the horizontal zero padding AND kh into K.

        Returns wband (3*lanes, lanes) bf16 and bias row (1, lanes) f32.  LHS column
        layout is [kh block | kh block | kh block], each block lane = w_in*ci + ci.
        """
        cout, ci = w_oihw.shape[0], w_oihw.shape[1]
        w = w_oihw.astype(jnp.float32)
        blocks = []
        for kh in range(3):
            # band[w_in*ci + p, w_out*cout + q] = w[q, p, kh, kw]  where
            # w_in = w_out + kw - 1; out-of-range w_in simply has no row (== zero pad)
            band = sum(jnp.kron(jnp.eye(W, W, k=1 - kw, dtype=jnp.float32),
                                w[:, :, kh, kw].T)
                       for kw in range(3))                       # (W*ci, W*cout)
            band = jnp.pad(band, ((0, lanes - W * ci), (0, lanes - W * cout)))
            blocks.append(band)
        wband = jnp.concatenate(blocks, axis=0).astype(compute_dtype)  # (3*lanes, lanes)
        brow = jnp.pad(jnp.tile(b.astype(jnp.float32), (W,)),
                       (0, lanes - W * cout)).reshape(1, lanes)
        return wband, brow

    wopen, bopen = conv_band(params["open_w"], params["open_b"])
    steps = [conv_band(w, b) for w, b in zip(params["step_w"], params["step_b"])]
    wstep = jnp.stack([w for w, _ in steps])       # (NSTEPS, 3*lanes, lanes)
    bstep = jnp.stack([b for _, b in steps])       # (NSTEPS, 1, lanes)

    close_w = params["close_w"].astype(jnp.float32)
    close_b = params["close_b"].astype(jnp.float32)
    nclasses, feat = close_w.shape
    assert feat == C * H * W
    assert nclasses <= OUT_PAD, "NCLASSES must fit in the 128-lane padded output"
    # Permute torch's NCHW-flatten column order to our (h, w, c) order, flatten to a
    # single (H*W*C, OUT_PAD) matmul weight, and pad classes lane-dense to 128.
    wcl = jnp.transpose(close_w.reshape(nclasses, C, H, W), (2, 3, 1, 0))  # (H,W,C,O)
    wcl = wcl.reshape(H * W * C, nclasses)
    wclose = jnp.pad(wcl, ((0, 0), (0, OUT_PAD - nclasses))).astype(compute_dtype)
    bclose = jnp.pad(close_b, (0, OUT_PAD - nclasses)).reshape(1, OUT_PAD)

    return dict(wopen=wopen, bopen=bopen, wstep=wstep, bstep=bstep,
                wclose=wclose, bclose=bclose)


# ----------------------------------------------------------------------------
# SerialNet forward:  close_nn(serial_nn(open_nn(x)))  -- one pallas_call.
# ----------------------------------------------------------------------------
def serialnet_forward(x_nchw, prep, *, nclasses):
    N, cin, H, W = x_nchw.shape
    lanes = prep["bopen"].shape[1]
    nsteps = prep["wstep"].shape[0]
    out_pad = prep["bclose"].shape[1]

    # Batch tile: keep matmul M = n_tile*H large, but shard big batches across the
    # parallel grid axis (both v7x TensorCores + pipelined input DMA).
    n_tile = N
    if N > 16:
        for t in (32, 16, 8, 4):
            if N % t == 0:
                n_tile = t
                break
    assert N % n_tile == 0
    grid = (N // n_tile,)

    # glue: NCHW -> (N, H, W*cin), zero-padded lane-dense to `lanes`, bf16 once.
    x2d = jnp.transpose(x_nchw, (0, 2, 3, 1)).reshape(N, H, W * cin)
    x2d = jnp.pad(x2d, ((0, 0), (0, 0), (0, lanes - W * cin))).astype(COMPUTE_DTYPE)

    kernel = functools.partial(_serialnet_kernel, n_tile=n_tile, H=H, lanes=lanes,
                               nsteps=nsteps, dt=DT)

    # Explicit VMEM budget: double-buffered per-block inputs/outputs + scratch,
    # capped at v7x's 64 MiB physical VMEM.
    def _nb(shape, dt_):
        return int(np.prod(shape)) * jnp.dtype(dt_).itemsize
    io_bytes = (_nb((n_tile, H, lanes), COMPUTE_DTYPE)
                + _nb(prep["wopen"].shape, COMPUTE_DTYPE)
                + _nb(prep["bopen"].shape, jnp.float32)
                + _nb(prep["wstep"].shape, COMPUTE_DTYPE)
                + _nb(prep["bstep"].shape, jnp.float32)
                + _nb(prep["wclose"].shape, COMPUTE_DTYPE)
                + _nb(prep["bclose"].shape, jnp.float32)
                + _nb((n_tile, out_pad), jnp.float32))
    scratch_bytes = (_nb((n_tile, H + 2, lanes), COMPUTE_DTYPE)
                     + _nb((n_tile, H, lanes), jnp.float32))
    vmem_limit = int(min(64 << 20, max(32 << 20, 2 * io_bytes + scratch_bytes + (4 << 20))))

    # TODO(synk): for large NSTEPS/C, move the step loop onto an "arbitrary" grid axis
    # (wstep BlockSpec (1, 3*lanes, lanes), open/close gated with pl.when) so only the
    # current+next step weights are resident -- needed once all-steps weights outgrow VMEM.
    out = pl.pallas_call(
        kernel,
        out_shape=jax.ShapeDtypeStruct((N, out_pad), jnp.float32),
        grid=grid,
        in_specs=[
            pl.BlockSpec((n_tile, H, lanes), lambda b: (b, 0, 0)),
            pl.BlockSpec(prep["wopen"].shape, lambda b: (0, 0)),
            pl.BlockSpec(prep["bopen"].shape, lambda b: (0, 0)),
            pl.BlockSpec(prep["wstep"].shape, lambda b: (0, 0, 0)),
            pl.BlockSpec(prep["bstep"].shape, lambda b: (0, 0, 0)),
            pl.BlockSpec(prep["wclose"].shape, lambda b: (0, 0)),
            pl.BlockSpec(prep["bclose"].shape, lambda b: (0, 0)),
        ],
        out_specs=pl.BlockSpec((n_tile, out_pad), lambda b: (b, 0)),
        scratch_shapes=[
            pltpu.VMEM((n_tile, H + 2, lanes), COMPUTE_DTYPE),  # shared padded act (bf16)
            pltpu.VMEM((n_tile, H, lanes), jnp.float32),        # f32 residual state
        ],
        compiler_params=pltpu.CompilerParams(
            dimension_semantics=("parallel",),
            vmem_limit_bytes=vmem_limit),
    )(x2d, prep["wopen"], prep["bopen"], prep["wstep"], prep["bstep"],
      prep["wclose"], prep["bclose"])
    return out[:, :nclasses]


# Pure-JAX reference (same math, XLA ops) for a sanity check.
def serialnet_reference(x_nchw, params):
    def conv(x, w, b):
        y = jax.lax.conv_general_dilated(
            x, w, window_strides=(1, 1), padding="SAME",
            dimension_numbers=("NCHW", "OIHW", "NCHW"))
        return y + b.reshape(1, -1, 1, 1)

    x = jax.nn.relu(conv(x_nchw, params["open_w"], params["open_b"]))
    for w, b in zip(params["step_w"], params["step_b"]):
        x = x + DT * jax.nn.relu(conv(x, w, b))
    flat = x.reshape(x.shape[0], -1)
    return flat @ params["close_w"].T + params["close_b"]


if __name__ == "__main__":
    N, C_IN, H, W = 2, 4, 16, 16
    C, NSTEPS, NCLASSES = 8, 2, 10

    key = jax.random.PRNGKey(0)
    ks = jax.random.split(key, 9)
    params = {
        "open_w": 0.1 * jax.random.normal(ks[0], (C, C_IN, 3, 3), jnp.float32),
        "open_b": 0.1 * jax.random.normal(ks[1], (C,), jnp.float32),
        "step_w": [0.1 * jax.random.normal(ks[2 + 2 * i], (C, C, 3, 3), jnp.float32)
                   for i in range(NSTEPS)],
        "step_b": [0.1 * jax.random.normal(ks[3 + 2 * i], (C,), jnp.float32)
                   for i in range(NSTEPS)],
        "close_w": 0.05 * jax.random.normal(ks[6], (NCLASSES, C * H * W), jnp.float32),
        "close_b": 0.05 * jax.random.normal(ks[7], (NCLASSES,), jnp.float32),
    }
    x = jax.random.normal(ks[8], (N, C_IN, H, W), jnp.float32)

    prep = prepare_params(params, H=H, W=W)       # hoisted weight prep (runs once)
    fwd = jax.jit(functools.partial(serialnet_forward, nclasses=NCLASSES))
    y = jax.block_until_ready(fwd(x, prep))

    y_ref = np.asarray(serialnet_reference(x, params))
    y_np = np.asarray(y)
    assert y_np.shape == (N, NCLASSES)
    assert np.all(np.isfinite(y_np))
    np.testing.assert_allclose(y_np, y_ref, rtol=2e-2, atol=2e-2)

    print("KERNEL_OK")
</pallas_src>

<mosaic_0001>
module attributes {stable_mosaic.version = 11 : i64} {
  func.func @_serialnet_kernel(%arg0: i32, %arg1: memref<2x16x128xbf16, #tpu.memory_space<vmem>>, %arg2: memref<384x128xbf16, #tpu.memory_space<vmem>>, %arg3: memref<1x128xf32, #tpu.memory_space<vmem>>, %arg4: memref<2x384x128xbf16, #tpu.memory_space<vmem>>, %arg5: memref<2x1x128xf32, #tpu.memory_space<vmem>>, %arg6: memref<2048x128xbf16, #tpu.memory_space<vmem>>, %arg7: memref<1x128xf32, #tpu.memory_space<vmem>>, %arg8: memref<2x128xf32, #tpu.memory_space<vmem>>, %arg9: memref<2x18x128xbf16, #tpu.memory_space<vmem>>, %arg10: memref<2x16x128xf32, #tpu.memory_space<vmem>>) attributes {dimension_semantics = [#tpu.dimension_semantics<parallel>], iteration_bounds = array<i64: 1>, scalar_prefetch = 0 : i64, scratch_operands = 2 : i64, tpu.core_type = #tpu.core_type<tc>, window_params = [{transform_indices = @transform_0, window_bounds = array<i64: 2, 16, 128>}, {pipeline_mode = #tpu.pipeline_mode<synchronous>, transform_indices = @transform_1, window_bounds = array<i64: 384, 128>}, {pipeline_mode = #tpu.pipeline_mode<synchronous>, transform_indices = @transform_2, window_bounds = array<i64: 1, 128>}, {pipeline_mode = #tpu.pipeline_mode<synchronous>, transform_indices = @transform_3, window_bounds = array<i64: 2, 384, 128>}, {pipeline_mode = #tpu.pipeline_mode<synchronous>, transform_indices = @transform_4, window_bounds = array<i64: 2, 1, 128>}, {pipeline_mode = #tpu.pipeline_mode<synchronous>, transform_indices = @transform_5, window_bounds = array<i64: 2048, 128>}, {pipeline_mode = #tpu.pipeline_mode<synchronous>, transform_indices = @transform_6, window_bounds = array<i64: 1, 128>}, {transform_indices = @transform_7, window_bounds = array<i64: 2, 128>}]} {
    %cst = arith.constant 0.000000e+00 : bf16
    %0 = vector.broadcast %cst : bf16 to vector<2x1x128xbf16>
    %c0 = arith.constant 0 : index
    %c0_0 = arith.constant 0 : index
    %c0_1 = arith.constant 0 : index
    %1 = vector.load %arg9[%c0, %c0_0, %c0_1] : memref<2x18x128xbf16, #tpu.memory_space<vmem>>, vector<2x1x128xbf16>
    tpu.vector_store %arg9[%c0, %c0_0, %c0_1], %0 {strides = array<i32>} : memref<2x18x128xbf16, #tpu.memory_space<vmem>>, vector<2x1x128xbf16>,
    %c0_2 = arith.constant 0 : index
    %c17 = arith.constant 17 : index
    %c0_3 = arith.constant 0 : index
    %2 = vector.load %arg9[%c0_2, %c17, %c0_3] : memref<2x18x128xbf16, #tpu.memory_space<vmem>>, vector<2x1x128xbf16>
    tpu.vector_store %arg9[%c0_2, %c17, %c0_3], %0 {strides = array<i32>} : memref<2x18x128xbf16, #tpu.memory_space<vmem>>, vector<2x1x128xbf16>,
    %c0_4 = arith.constant 0 : index
    %c0_5 = arith.constant 0 : index
    %c0_6 = arith.constant 0 : index
    %3 = vector.load %arg1[%c0_4, %c0_5, %c0_6] : memref<2x16x128xbf16, #tpu.memory_space<vmem>>, vector<2x16x128xbf16>
    %c0_7 = arith.constant 0 : index
    %c1 = arith.constant 1 : index
    %c0_8 = arith.constant 0 : index
    %4 = vector.load %arg9[%c0_7, %c1, %c0_8] : memref<2x18x128xbf16, #tpu.memory_space<vmem>>, vector<2x16x128xbf16>
    tpu.vector_store %arg9[%c0_7, %c1, %c0_8], %3 {strides = array<i32>} : memref<2x18x128xbf16, #tpu.memory_space<vmem>>, vector<2x16x128xbf16>,
    %c0_9 = arith.constant 0 : index
    %c0_10 = arith.constant 0 : index
    %5 = vector.load %arg2[%c0_9, %c0_10] : memref<384x128xbf16, #tpu.memory_space<vmem>>, vector<384x128xbf16>
    %c0_11 = arith.constant 0 : index
    %c0_12 = arith.constant 0 : index
    %6 = vector.load %arg3[%c0_11, %c0_12] : memref<1x128xf32, #tpu.memory_space<vmem>>, vector<1x128xf32>
    %c0_13 = arith.constant 0 : index
    %c0_14 = arith.constant 0 : index
    %c0_15 = arith.constant 0 : index
    %7 = vector.load %arg9[%c0_13, %c0_14, %c0_15] : memref<2x18x128xbf16, #tpu.memory_space<vmem>>, vector<2x16x128xbf16>
    %c0_16 = arith.constant 0 : index
    %c1_17 = arith.constant 1 : index
    %c0_18 = arith.constant 0 : index
    %8 = vector.load %arg9[%c0_16, %c1_17, %c0_18] : memref<2x18x128xbf16, #tpu.memory_space<vmem>>, vector<2x16x128xbf16>
    %c0_19 = arith.constant 0 : index
    %c2 = arith.constant 2 : index
    %c0_20 = arith.constant 0 : index
    %9 = vector.load %arg9[%c0_19, %c2, %c0_20] : memref<2x18x128xbf16, #tpu.memory_space<vmem>>, vector<2x16x128xbf16>
    %10 = tpu.concatenate %7, %8, %9 in 2 : vector<2x16x128xbf16>, vector<2x16x128xbf16>, vector<2x16x128xbf16> -> vector<2x16x384xbf16>
    %11 = vector.shape_cast %10 : vector<2x16x384xbf16> to vector<32x384xbf16>
    %cst_21 = arith.constant dense<0.000000e+00> : vector<32x128xf32>
    %12 = tpu.matmul %11, %5, %cst_21 {dimension_numbers = #tpu.dot_dimension_numbers<[1], [0], [0], [1], [0, 0, 1, 1], [], []>} : vector<32x384xbf16>, vector<384x128xbf16>, vector<32x128xf32> -> vector<32x128xf32>
    %13 = vector.broadcast %6 : vector<1x128xf32> to vector<32x128xf32>
    %14 = arith.addf %12, %13 : vector<32x128xf32>
    %cst_22 = arith.constant 0.000000e+00 : f32
    %15 = vector.broadcast %cst_22 : f32 to vector<32x128xf32>
    %16 = arith.maximumf %14, %15 : vector<32x128xf32>
    %17 = vector.shape_cast %16 : vector<32x128xf32> to vector<2x16x128xf32>
    %c0_23 = arith.constant 0 : index
    %c0_24 = arith.constant 0 : index
    %c0_25 = arith.constant 0 : index
    %18 = vector.load %arg10[%c0_23, %c0_24, %c0_25] : memref<2x16x128xf32, #tpu.memory_space<vmem>>, vector<2x16x128xf32>
    tpu.vector_store %arg10[%c0_23, %c0_24, %c0_25], %17 {strides = array<i32>} : memref<2x16x128xf32, #tpu.memory_space<vmem>>, vector<2x16x128xf32>,
    %c0_i32 = arith.constant 0 : i32
    %c0_26 = arith.constant 0 : index
    %c0_27 = arith.constant 0 : index
    %c0_28 = arith.constant 0 : index
    %19 = vector.load %arg10[%c0_26, %c0_27, %c0_28] : memref<2x16x128xf32, #tpu.memory_space<vmem>>, vector<2x16x128xf32>
    %20 = arith.truncf %19 : vector<2x16x128xf32> to vector<2x16x128xbf16>
    %c0_29 = arith.constant 0 : index
    %c1_30 = arith.constant 1 : index
    %c0_31 = arith.constant 0 : index
    %21 = vector.load %arg9[%c0_29, %c1_30, %c0_31] : memref<2x18x128xbf16, #tpu.memory_space<vmem>>, vector<2x16x128xbf16>
    tpu.vector_store %arg9[%c0_29, %c1_30, %c0_31], %20 {strides = array<i32>} : memref<2x18x128xbf16, #tpu.memory_space<vmem>>, vector<2x16x128xbf16>,
    %22 = arith.index_cast %c0_i32 : i32 to index
    %c0_32 = arith.constant 0 : index
    %c0_33 = arith.constant 0 : index
    %23 = vector.load %arg4[%22, %c0_32, %c0_33] : memref<2x384x128xbf16, #tpu.memory_space<vmem>>, vector<1x384x128xbf16>
    %24 = vector.shape_cast %23 : vector<1x384x128xbf16> to vector<384x128xbf16>
    %25 = arith.index_cast %c0_i32 : i32 to index
    %c0_34 = arith.constant 0 : index
    %c0_35 = arith.constant 0 : index
    %26 = vector.load %arg5[%25, %c0_34, %c0_35] : memref<2x1x128xf32, #tpu.memory_space<vmem>>, vector<1x1x128xf32>
    %27 = vector.shape_cast %26 : vector<1x1x128xf32> to vector<1x128xf32>
    %c0_36 = arith.constant 0 : index
    %c0_37 = arith.constant 0 : index
    %c0_38 = arith.constant 0 : index
    %28 = vector.load %arg9[%c0_36, %c0_37, %c0_38] : memref<2x18x128xbf16, #tpu.memory_space<vmem>>, vector<2x16x128xbf16>
    %c0_39 = arith.constant 0 : index
    %c1_40 = arith.constant 1 : index
    %c0_41 = arith.constant 0 : index
    %29 = vector.load %arg9[%c0_39, %c1_40, %c0_41] : memref<2x18x128xbf16, #tpu.memory_space<vmem>>, vector<2x16x128xbf16>
    %c0_42 = arith.constant 0 : index
    %c2_43 = arith.constant 2 : index
    %c0_44 = arith.constant 0 : index
    %30 = vector.load %arg9[%c0_42, %c2_43, %c0_44] : memref<2x18x128xbf16, #tpu.memory_space<vmem>>, vector<2x16x128xbf16>
    %31 = tpu.concatenate %28, %29, %30 in 2 : vector<2x16x128xbf16>, vector<2x16x128xbf16>, vector<2x16x128xbf16> -> vector<2x16x384xbf16>
    %32 = vector.shape_cast %31 : vector<2x16x384xbf16> to vector<32x384xbf16>
    %cst_45 = arith.constant dense<0.000000e+00> : vector<32x128xf32>
    %33 = tpu.matmul %32, %24, %cst_45 {dimension_numbers = #tpu.dot_dimension_numbers<[1], [0], [0], [1], [0, 0, 1, 1], [], []>} : vector<32x384xbf16>, vector<384x128xbf16>, vector<32x128xf32> -> vector<32x128xf32>
    %34 = vector.broadcast %27 : vector<1x128xf32> to vector<32x128xf32>
    %35 = arith.addf %33, %34 : vector<32x128xf32>
    %cst_46 = arith.constant 0.000000e+00 : f32
    %36 = vector.broadcast %cst_46 : f32 to vector<32x128xf32>
    %37 = arith.maximumf %35, %36 : vector<32x128xf32>
    %c0_47 = arith.constant 0 : index
    %c0_48 = arith.constant 0 : index
    %c0_49 = arith.constant 0 : index
    %38 = vector.load %arg10[%c0_47, %c0_48, %c0_49] : memref<2x16x128xf32, #tpu.memory_space<vmem>>, vector<2x16x128xf32>
    %39 = vector.shape_cast %37 : vector<32x128xf32> to vector<2x16x128xf32>
    %cst_50 = arith.constant 1.000000e-01 : f32
    %40 = vector.broadcast %cst_50 : f32 to vector<2x16x128xf32>
    %41 = arith.mulf %40, %39 : vector<2x16x128xf32>
    %42 = arith.addf %38, %41 : vector<2x16x128xf32>
    %c0_51 = arith.constant 0 : index
    %c0_52 = arith.constant 0 : index
    %c0_53 = arith.constant 0 : index
    %43 = vector.load %arg10[%c0_51, %c0_52, %c0_53] : memref<2x16x128xf32, #tpu.memory_space<vmem>>, vector<2x16x128xf32>
    tpu.vector_store %arg10[%c0_51, %c0_52, %c0_53], %42 {strides = array<i32>} : memref<2x16x128xf32, #tpu.memory_space<vmem>>, vector<2x16x128xf32>,
    %c1_i32 = arith.constant 1 : i32
    %c0_54 = arith.constant 0 : index
    %c0_55 = arith.constant 0 : index
    %c0_56 = arith.constant 0 : index
    %44 = vector.load %arg10[%c0_54, %c0_55, %c0_56] : memref<2x16x128xf32, #tpu.memory_space<vmem>>, vector<2x16x128xf32>
    %45 = arith.truncf %44 : vector<2x16x128xf32> to vector<2x16x128xbf16>
    %c0_57 = arith.constant 0 : index
    %c1_58 = arith.constant 1 : index
    %c0_59 = arith.constant 0 : index
    %46 = vector.load %arg9[%c0_57, %c1_58, %c0_59] : memref<2x18x128xbf16, #tpu.memory_space<vmem>>, vector<2x16x128xbf16>
    tpu.vector_store %arg9[%c0_57, %c1_58, %c0_59], %45 {strides = array<i32>} : memref<2x18x128xbf16, #tpu.memory_space<vmem>>, vector<2x16x128xbf16>,
    %47 = arith.index_cast %c1_i32 : i32 to index
    %c0_60 = arith.constant 0 : index
    %c0_61 = arith.constant 0 : index
    %48 = vector.load %arg4[%47, %c0_60, %c0_61] : memref<2x384x128xbf16, #tpu.memory_space<vmem>>, vector<1x384x128xbf16>
    %49 = vector.shape_cast %48 : vector<1x384x128xbf16> to vector<384x128xbf16>
    %50 = arith.index_cast %c1_i32 : i32 to index
    %c0_62 = arith.constant 0 : index
    %c0_63 = arith.constant 0 : index
    %51 = vector.load %arg5[%50, %c0_62, %c0_63] : memref<2x1x128xf32, #tpu.memory_space<vmem>>, vector<1x1x128xf32>
    %52 = vector.shape_cast %51 : vector<1x1x128xf32> to vector<1x128xf32>
    %c0_64 = arith.constant 0 : index
    %c0_65 = arith.constant 0 : index
    %c0_66 = arith.constant 0 : index
    %53 = vector.load %arg9[%c0_64, %c0_65, %c0_66] : memref<2x18x128xbf16, #tpu.memory_space<vmem>>, vector<2x16x128xbf16>
    %c0_67 = arith.constant 0 : index
    %c1_68 = arith.constant 1 : index
    %c0_69 = arith.constant 0 : index
    %54 = vector.load %arg9[%c0_67, %c1_68, %c0_69] : memref<2x18x128xbf16, #tpu.memory_space<vmem>>, vector<2x16x128xbf16>
    %c0_70 = arith.constant 0 : index
    %c2_71 = arith.constant 2 : index
    %c0_72 = arith.constant 0 : index
    %55 = vector.load %arg9[%c0_70, %c2_71, %c0_72] : memref<2x18x128xbf16, #tpu.memory_space<vmem>>, vector<2x16x128xbf16>
    %56 = tpu.concatenate %53, %54, %55 in 2 : vector<2x16x128xbf16>, vector<2x16x128xbf16>, vector<2x16x128xbf16> -> vector<2x16x384xbf16>
    %57 = vector.shape_cast %56 : vector<2x16x384xbf16> to vector<32x384xbf16>
    %cst_73 = arith.constant dense<0.000000e+00> : vector<32x128xf32>
    %58 = tpu.matmul %57, %49, %cst_73 {dimension_numbers = #tpu.dot_dimension_numbers<[1], [0], [0], [1], [0, 0, 1, 1], [], []>} : vector<32x384xbf16>, vector<384x128xbf16>, vector<32x128xf32> -> vector<32x128xf32>
    %59 = vector.broadcast %52 : vector<1x128xf32> to vector<32x128xf32>
    %60 = arith.addf %58, %59 : vector<32x128xf32>
    %cst_74 = arith.constant 0.000000e+00 : f32
    %61 = vector.broadcast %cst_74 : f32 to vector<32x128xf32>
    %62 = arith.maximumf %60, %61 : vector<32x128xf32>
    %c0_75 = arith.constant 0 : index
    %c0_76 = arith.constant 0 : index
    %c0_77 = arith.constant 0 : index
    %63 = vector.load %arg10[%c0_75, %c0_76, %c0_77] : memref<2x16x128xf32, #tpu.memory_space<vmem>>, vector<2x16x128xf32>
    %64 = vector.shape_cast %62 : vector<32x128xf32> to vector<2x16x128xf32>
    %cst_78 = arith.constant 1.000000e-01 : f32
    %65 = vector.broadcast %cst_78 : f32 to vector<2x16x128xf32>
    %66 = arith.mulf %65, %64 : vector<2x16x128xf32>
    %67 = arith.addf %63, %66 : vector<2x16x128xf32>
    %c0_79 = arith.constant 0 : index
    %c0_80 = arith.constant 0 : index
    %c0_81 = arith.constant 0 : index
    %68 = vector.load %arg10[%c0_79, %c0_80, %c0_81] : memref<2x16x128xf32, #tpu.memory_space<vmem>>, vector<2x16x128xf32>
    tpu.vector_store %arg10[%c0_79, %c0_80, %c0_81], %67 {strides = array<i32>} : memref<2x16x128xf32, #tpu.memory_space<vmem>>, vector<2x16x128xf32>,
    %c2_i32 = arith.constant 2 : i32
    %c0_82 = arith.constant 0 : index
    %c0_83 = arith.constant 0 : index
    %c0_84 = arith.constant 0 : index
    %69 = vector.load %arg10[%c0_82, %c0_83, %c0_84] : memref<2x16x128xf32, #tpu.memory_space<vmem>>, vector<2x1x128xf32>
    %70 = vector.shape_cast %69 : vector<2x1x128xf32> to vector<2x128xf32>
    %c0_85 = arith.constant 0 : index
    %c1_86 = arith.constant 1 : index
    %c0_87 = arith.constant 0 : index
    %71 = vector.load %arg10[%c0_85, %c1_86, %c0_87] : memref<2x16x128xf32, #tpu.memory_space<vmem>>, vector<2x1x128xf32>
    %72 = vector.shape_cast %71 : vector<2x1x128xf32> to vector<2x128xf32>
    %c0_88 = arith.constant 0 : index
    %c2_89 = arith.constant 2 : index
    %c0_90 = arith.constant 0 : index
    %73 = vector.load %arg10[%c0_88, %c2_89, %c0_90] : memref<2x16x128xf32, #tpu.memory_space<vmem>>, vector<2x1x128xf32>
    %74 = vector.shape_cast %73 : vector<2x1x128xf32> to vector<2x128xf32>
    %c0_91 = arith.constant 0 : index
    %c3 = arith.constant 3 : index
    %c0_92 = arith.constant 0 : index
    %75 = vector.load %arg10[%c0_91, %c3, %c0_92] : memref<2x16x128xf32, #tpu.memory_space<vmem>>, vector<2x1x128xf32>
    %76 = vector.shape_cast %75 : vector<2x1x128xf32> to vector<2x128xf32>
    %c0_93 = arith.constant 0 : index
    %c4 = arith.constant 4 : index
    %c0_94 = arith.constant 0 : index
    %77 = vector.load %arg10[%c0_93, %c4, %c0_94] : memref<2x16x128xf32, #tpu.memory_space<vmem>>, vector<2x1x128xf32>
    %78 = vector.shape_cast %77 : vector<2x1x128xf32> to vector<2x128xf32>
    %c0_95 = arith.constant 0 : index
    %c5 = arith.constant 5 : index
    %c0_96 = arith.constant 0 : index
    %79 = vector.load %arg10[%c0_95, %c5, %c0_96] : memref<2x16x128xf32, #tpu.memory_space<vmem>>, vector<2x1x128xf32>
    %80 = vector.shape_cast %79 : vector<2x1x128xf32> to vector<2x128xf32>
    %c0_97 = arith.constant 0 : index
    %c6 = arith.constant 6 : index
    %c0_98 = arith.constant 0 : index
    %81 = vector.load %arg10[%c0_97, %c6, %c0_98] : memref<2x16x128xf32, #tpu.memory_space<vmem>>, vector<2x1x128xf32>
    %82 = vector.shape_cast %81 : vector<2x1x128xf32> to vector<2x128xf32>
    %c0_99 = arith.constant 0 : index
    %c7 = arith.constant 7 : index
    %c0_100 = arith.constant 0 : index
    %83 = vector.load %arg10[%c0_99, %c7, %c0_100] : memref<2x16x128xf32, #tpu.memory_space<vmem>>, vector<2x1x128xf32>
    %84 = vector.shape_cast %83 : vector<2x1x128xf32> to vector<2x128xf32>
    %c0_101 = arith.constant 0 : index
    %c8 = arith.constant 8 : index
    %c0_102 = arith.constant 0 : index
    %85 = vector.load %arg10[%c0_101, %c8, %c0_102] : memref<2x16x128xf32, #tpu.memory_space<vmem>>, vector<2x1x128xf32>
    %86 = vector.shape_cast %85 : vector<2x1x128xf32> to vector<2x128xf32>
    %c0_103 = arith.constant 0 : index
    %c9 = arith.constant 9 : index
    %c0_104 = arith.constant 0 : index
    %87 = vector.load %arg10[%c0_103, %c9, %c0_104] : memref<2x16x128xf32, #tpu.memory_space<vmem>>, vector<2x1x128xf32>
    %88 = vector.shape_cast %87 : vector<2x1x128xf32> to vector<2x128xf32>
    %c0_105 = arith.constant 0 : index
    %c10 = arith.constant 10 : index
    %c0_106 = arith.constant 0 : index
    %89 = vector.load %arg10[%c0_105, %c10, %c0_106] : memref<2x16x128xf32, #tpu.memory_space<vmem>>, vector<2x1x128xf32>
    %90 = vector.shape_cast %89 : vector<2x1x128xf32> to vector<2x128xf32>
    %c0_107 = arith.constant 0 : index
    %c11 = arith.constant 11 : index
    %c0_108 = arith.constant 0 : index
    %91 = vector.load %arg10[%c0_107, %c11, %c0_108] : memref<2x16x128xf32, #tpu.memory_space<vmem>>, vector<2x1x128xf32>
    %92 = vector.shape_cast %91 : vector<2x1x128xf32> to vector<2x128xf32>
    %c0_109 = arith.constant 0 : index
    %c12 = arith.constant 12 : index
    %c0_110 = arith.constant 0 : index
    %93 = vector.load %arg10[%c0_109, %c12, %c0_110] : memref<2x16x128xf32, #tpu.memory_space<vmem>>, vector<2x1x128xf32>
    %94 = vector.shape_cast %93 : vector<2x1x128xf32> to vector<2x128xf32>
    %c0_111 = arith.constant 0 : index
    %c13 = arith.constant 13 : index
    %c0_112 = arith.constant 0 : index
    %95 = vector.load %arg10[%c0_111, %c13, %c0_112] : memref<2x16x128xf32, #tpu.memory_space<vmem>>, vector<2x1x128xf32>
    %96 = vector.shape_cast %95 : vector<2x1x128xf32> to vector<2x128xf32>
    %c0_113 = arith.constant 0 : index
    %c14 = arith.constant 14 : index
    %c0_114 = arith.constant 0 : index
    %97 = vector.load %arg10[%c0_113, %c14, %c0_114] : memref<2x16x128xf32, #tpu.memory_space<vmem>>, vector<2x1x128xf32>
    %98 = vector.shape_cast %97 : vector<2x1x128xf32> to vector<2x128xf32>
    %c0_115 = arith.constant 0 : index
    %c15 = arith.constant 15 : index
    %c0_116 = arith.constant 0 : index
    %99 = vector.load %arg10[%c0_115, %c15, %c0_116] : memref<2x16x128xf32, #tpu.memory_space<vmem>>, vector<2x1x128xf32>
    %100 = vector.shape_cast %99 : vector<2x1x128xf32> to vector<2x128xf32>
    %101 = tpu.concatenate %70, %72, %74, %76, %78, %80, %82, %84, %86, %88, %90, %92, %94, %96, %98, %100 in 1 : vector<2x128xf32>, vector<2x128xf32>, vector<2x128xf32>, vector<2x128xf32>, vector<2x128xf32>, vector<2x128xf32>, vector<2x128xf32>, vector<2x128xf32>, vector<2x128xf32>, vector<2x128xf32>, vector<2x128xf32>, vector<2x128xf32>, vector<2x128xf32>, vector<2x128xf32>, vector<2x128xf32>, vector<2x128xf32> -> vector<2x2048xf32>
    %102 = arith.truncf %101 : vector<2x2048xf32> to vector<2x2048xbf16>
    %c0_117 = arith.constant 0 : index
    %c0_118 = arith.constant 0 : index
    %103 = vector.load %arg6[%c0_117, %c0_118] : memref<2048x128xbf16, #tpu.memory_space<vmem>>, vector<2048x128xbf16>
    %cst_119 = arith.constant dense<0.000000e+00> : vector<2x128xf32>
    %104 = tpu.matmul %102, %103, %cst_119 {dimension_numbers = #tpu.dot_dimension_numbers<[1], [0], [0], [1], [0, 0, 1, 1], [], []>} : vector<2x2048xbf16>, vector<2048x128xbf16>, vector<2x128xf32> -> vector<2x128xf32>
    %c0_120 = arith.constant 0 : index
    %c0_121 = arith.constant 0 : index
    %105 = vector.load %arg7[%c0_120, %c0_121] : memref<1x128xf32, #tpu.memory_space<vmem>>, vector<1x128xf32>
    %106 = vector.broadcast %105 : vector<1x128xf32> to vector<2x128xf32>
    %107 = arith.addf %104, %106 : vector<2x128xf32>
    %c0_122 = arith.constant 0 : index
    %c0_123 = arith.constant 0 : index
    %108 = vector.load %arg8[%c0_122, %c0_123] : memref<2x128xf32, #tpu.memory_space<vmem>>, vector<2x128xf32>
    tpu.vector_store %arg8[%c0_122, %c0_123], %107 {strides = array<i32>} : memref<2x128xf32, #tpu.memory_space<vmem>>, vector<2x128xf32>,
    return
  }
  func.func @transform_0(%arg0: i32) -> (i32, i32, i32) {
    %c0_i32 = arith.constant 0 : i32
    %c0_i32_0 = arith.constant 0 : i32
    %c0_i32_1 = arith.constant 0 : i32
    return %arg0, %c0_i32, %c0_i32_0 : i32, i32, i32
  }
  func.func @transform_1(%arg0: i32) -> (i32, i32) {
    %c0_i32 = arith.constant 0 : i32
    %c0_i32_0 = arith.constant 0 : i32
    %c0_i32_1 = arith.constant 0 : i32
    return %c0_i32, %c0_i32_0 : i32, i32
  }
  func.func @transform_2(%arg0: i32) -> (i32, i32) {
    %c0_i32 = arith.constant 0 : i32
    %c0_i32_0 = arith.constant 0 : i32
    %c0_i32_1 = arith.constant 0 : i32
    return %c0_i32, %c0_i32_0 : i32, i32
  }
  func.func @transform_3(%arg0: i32) -> (i32, i32, i32) {
    %c0_i32 = arith.constant 0 : i32
    %c0_i32_0 = arith.constant 0 : i32
    %c0_i32_1 = arith.constant 0 : i32
    %c0_i32_2 = arith.constant 0 : i32
    return %c0_i32, %c0_i32_0, %c0_i32_1 : i32, i32, i32
  }
  func.func @transform_4(%arg0: i32) -> (i32, i32, i32) {
    %c0_i32 = arith.constant 0 : i32
    %c0_i32_0 = arith.constant 0 : i32
    %c0_i32_1 = arith.constant 0 : i32
    %c0_i32_2 = arith.constant 0 : i32
    return %c0_i32, %c0_i32_0, %c0_i32_1 : i32, i32, i32
  }
  func.func @transform_5(%arg0: i32) -> (i32, i32) {
    %c0_i32 = arith.constant 0 : i32
    %c0_i32_0 = arith.constant 0 : i32
    %c0_i32_1 = arith.constant 0 : i32
    return %c0_i32, %c0_i32_0 : i32, i32
  }
  func.func @transform_6(%arg0: i32) -> (i32, i32) {
    %c0_i32 = arith.constant 0 : i32
    %c0_i32_0 = arith.constant 0 : i32
    %c0_i32_1 = arith.constant 0 : i32
    return %c0_i32, %c0_i32_0 : i32, i32
  }
  func.func @transform_7(%arg0: i32) -> (i32, i32) {
    %c0_i32 = arith.constant 0 : i32
    %c0_i32_0 = arith.constant 0 : i32
    return %arg0, %c0_i32 : i32, i32
  }
}

</mosaic_0001>

<llo_original>
// kernel: serialnet_forward.1
$region0: #{serialnet_forward.1}
  #allocation0 [shape = 'u32[]', space=smem, size = 0x4, offset = 0x4, fixed_abs, tag = 'smem constant byte address 0x4 - core index']
  #allocation1 [shape = 'u32[144,128]{1,0:T(1,128)}', space=vmem, size = 0x12000, scoped, tag = 'internal scratch']
  #allocation2 [shape = 'bf16[2,18,128]{2,1,0:T(8,128)(2,1)}', space=vmem, size = 0x3000, scoped, tag = 'scratch operand']
  #allocation3 [shape = 'f32[2,16,128]{2,1,0:T(8,128)}', space=vmem, size = 0x4000, scoped, tag = 'scratch operand']
  %s0 = inlined_call_operand.vmem [shape: bf16[2,16,128], index: 0, kind: input, shape index: {}]
  %s1 = inlined_call_operand.hbm [shape: bf16[384,128], index: 1, kind: input, shape index: {}]
  %s2 = inlined_call_operand.vmem [shape: f32[1,128], index: 2, kind: input, shape index: {}]
  %s3 = inlined_call_operand.vmem [shape: bf16[2,384,128], index: 3, kind: input, shape index: {}]
  %s4 = inlined_call_operand.vmem [shape: f32[2,1,128], index: 4, kind: input, shape index: {}]
  %s5 = inlined_call_operand.hbm [shape: bf16[2048,128], index: 5, kind: input, shape index: {}]
  %s6 = inlined_call_operand.vmem [shape: f32[1,128], index: 6, kind: input, shape index: {}]
  %s7 = inlined_call_operand.hbm [shape: f32[2,128], index: 7, kind: output, shape index: {}]
  %s8 = sld [smem:[#allocation0]]
  $region46: #{serialnet_forward.1} parent=0
    _
  %s10 = ssub.s32 1, %s8
  %s11 = scalar_select 0, %s10, %s8
  $region1: #{serialnet_forward.1} parent=0
    #allocation4 [shape = 'u8[98304]{0}', space=vmem, size = 0x18000, scoped, tag = 'input window, operand 1, single buffered']
    #allocation5 [shape = 's32[1]{0}', space=sflag, size = 0x4, scoped, tag = 'scoped memory for serialnet_forward.1']
    #allocation6 [shape = 's32[1]{0}', space=sflag, size = 0x4, scoped, tag = 'scoped memory for serialnet_forward.1']
    #allocation7 [shape = 'u8[524288]{0}', space=vmem, size = 0x80000, scoped, tag = 'input window, operand 5, single buffered']
    #allocation8 [shape = 's32[1]{0}', space=sflag, size = 0x4, scoped, tag = 'scoped memory for serialnet_forward.1']
    #allocation9 [shape = 'u8[1024]{0}', space=vmem, size = 0x400, scoped, tag = 'output window, operand 0, single buffered']
    %12 = vsyncpa [#allocation5], 0
    %13 = vsyncpa [#allocation8], 0
    %14 = vsyncpa [#allocation6], 0
    // Predicated region
    $region2: #{serialnet_forward.1} parent=1 // pred_check
      _
    $region3: #{serialnet_forward.1} parent=1 // pred_check_branch
      %16 = sbr.rel (0) target = $region5
    $region4: #{serialnet_forward.1} parent=1 // pred_region
      _
    $region5: #{serialnet_forward.1} parent=1 // pred_fallthru
      _
    // Predicated region
    $region6: #{serialnet_forward.1} parent=1 // pred_check
      _
    $region7: #{serialnet_forward.1} parent=1 // pred_check_branch
      %18 = sbr.rel (0) target = $region9
    $region8: #{serialnet_forward.1} parent=1 // pred_region
      %s20 = ssub.s32 3072, 3072
      %21 = vsyncadd [#allocation5], %s20
      %s22 = sshll.u32 [#allocation4], 4
      %s23 = int_to_ptr.vmem [resolvable:$true] %s22
      %28 = dma.hbm_to_vmem [thread:$0]  %s1, 3072, %s23, [#allocation5], 64, 64, 4
    $region9: #{serialnet_forward.1} parent=1 // pred_fallthru
      _
    // Predicated region
    $region10: #{serialnet_forward.1} parent=1 // pred_check
      _
    $region11: #{serialnet_forward.1} parent=1 // pred_check_branch
      %30 = sbr.rel (0) target = $region13
    $region12: #{serialnet_forward.1} parent=1 // pred_region
      _
    $region13: #{serialnet_forward.1} parent=1 // pred_fallthru
      _
    // Predicated region
    $region14: #{serialnet_forward.1} parent=1 // pred_check
      _
    $region15: #{serialnet_forward.1} parent=1 // pred_check_branch
      %32 = sbr.rel (0) target = $region17
    $region16: #{serialnet_forward.1} parent=1 // pred_region
      _
    $region17: #{serialnet_forward.1} parent=1 // pred_fallthru
      _
    // Predicated region
    $region18: #{serialnet_forward.1} parent=1 // pred_check
      _
    $region19: #{serialnet_forward.1} parent=1 // pred_check_branch
      %34 = sbr.rel (0) target = $region21
    $region20: #{serialnet_forward.1} parent=1 // pred_region
      _
    $region21: #{serialnet_forward.1} parent=1 // pred_fallthru
      _
    // Predicated region
    $region22: #{serialnet_forward.1} parent=1 // pred_check
      _
    $region23: #{serialnet_forward.1} parent=1 // pred_check_branch
      %36 = sbr.rel (0) target = $region25
    $region24: #{serialnet_forward.1} parent=1 // pred_region
      %s38 = ssub.s32 16384, 16384
      %39 = vsyncadd [#allocation8], %s38
      %s40 = sshll.u32 [#allocation7], 4
      %s41 = int_to_ptr.vmem [resolvable:$true] %s40
      %46 = dma.hbm_to_vmem [thread:$0]  %s5, 16384, %s41, [#allocation8], 64, 64, 4
    $region25: #{serialnet_forward.1} parent=1 // pred_fallthru
      _
    // Predicated region
    $region26: #{serialnet_forward.1} parent=1 // pred_check
      _
    $region27: #{serialnet_forward.1} parent=1 // pred_check_branch
      %48 = sbr.rel (0) target = $region29
    $region28: #{serialnet_forward.1} parent=1 // pred_region
      _
    $region29: #{serialnet_forward.1} parent=1 // pred_fallthru
      _
    // Predicated region
    $region30: #{serialnet_forward.1} parent=1 // pred_check
      _
    $region31: #{serialnet_forward.1} parent=1 // pred_check_branch
      %50 = sbr.rel (0) target = $region33
    $region32: #{serialnet_forward.1} parent=1 // pred_region
      %51 = dma.done [#allocation5], 3072
    $region33: #{serialnet_forward.1} parent=1 // pred_fallthru
      _
    // Predicated region
    $region34: #{serialnet_forward.1} parent=1 // pred_check
      _
    $region35: #{serialnet_forward.1} parent=1 // pred_check_branch
      %53 = sbr.rel (0) target = $region37
    $region36: #{serialnet_forward.1} parent=1 // pred_region
      %54 = dma.done [#allocation8], 16384
    $region37: #{serialnet_forward.1} parent=1 // pred_fallthru
      _
    %vm56 = vcmask 1040384
    %vm57 = vsmask.f32 256
    %vm58 = vmand %vm56, %vm57
    %v59 = vld [vmem:[#allocation2] sm:$0x1]
    %v60 = vsel %vm58, 0, %v59
    %61 = vst [vmem:[#allocation2] sm:$0x1] %v60
    %v62 = vld [vmem:[#allocation2 + $0xc] sm:$0x1]
    %v63 = vsel %vm58, 0, %v62
    %64 = vst [vmem:[#allocation2 + $0xc] sm:$0x1] %v63
    %vm65 = vsmask.f32 7938
    %vm66 = vmand %vm56, %vm65
    %v67 = vld [vmem:[#allocation2 + $0x8] sm:$0x1]
    %v68 = vsel %vm66, 0, %v67
    %69 = vst [vmem:[#allocation2 + $0x8] sm:$0x1] %v68
    %v70 = vld [vmem:[#allocation2 + $0x14] sm:$0x1]
    %v71 = vsel %vm66, 0, %v70
    %72 = vst [vmem:[#allocation2 + $0x14] sm:$0x1] %v71
    %v73 = vld [vmem:[%s0] sm:$0xf]
    %v74 = vld [vmem:[%s0 + $0x4] sm:$0xf]
    %v75 = vld [vmem:[%s0 + $0x8] sm:$0xf]
    %v76 = vld [vmem:[%s0 + $0xc] sm:$0xf]
    %vm77 = vsmask.f32 4368
    %vm78 = vmor %vm57, %vm77
    %v80 = vshrl.u32 %v73, 16
    %v82 = vrot.slane %v80, 7
    %v83 = vshll.u32 %v73, 16
    %v85 = vor.u32 %v82, %v83
    %v86 = vrot.slane %v82, 4
    %v88 = vshrl.u32 %v74, 16
    %v90 = vrot.slane %v88, 7
    %v91 = vshll.u32 %v74, 16
    %v93 = vor.u32 %v90, %v91
    %v94 = vsel %vm78, %v86, %v93
    %v95 = vrot.slane %v90, 4
    %v97 = vshrl.u32 %v75, 16
    %v99 = vrot.slane %v97, 7
    %v100 = vshll.u32 %v75, 16
    %v102 = vor.u32 %v99, %v100
    %v103 = vrot.slane %v99, 4
    %v105 = vshrl.u32 %v76, 16
    %v107 = vrot.slane %v105, 7
    %v108 = vshll.u32 %v76, 16
    %v110 = vor.u32 %v107, %v108
    %v111 = vsel %vm78, %v103, %v110
    %v112 = vrot.slane %v107, 4
    %vm119 = vcmask 1043456
    %vm120 = vmand %vm119, %vm65
    %v121 = vld [vmem:[#allocation2] sm:$0xf]
    %v122 = vsel %vm120, %v85, %v121
    %123 = vst [vmem:[#allocation2] sm:$0xf] %v122
    %124 = vst [vmem:[#allocation2 + $0x4] sm:$0xf] %v94
    %v125 = vld [vmem:[#allocation2 + $0x8] sm:$0x1]
    %v126 = vsel %vm58, %v95, %v125
    %127 = vst [vmem:[#allocation2 + $0x8] sm:$0x1] %v126
    %v128 = vld [vmem:[#allocation2 + $0xc] sm:$0xf]
    %v129 = vsel %vm120, %v102, %v128
    %130 = vst [vmem:[#allocation2 + $0xc] sm:$0xf] %v129
    %131 = vst [vmem:[#allocation2 + $0x10] sm:$0xf] %v111
    %v132 = vld [vmem:[#allocation2 + $0x14] sm:$0x1]
    %v133 = vsel %vm58, %v112, %v132
    %134 = vst [vmem:[#allocation2 + $0x14] sm:$0x1] %v133
    %v135 = vld [vmem:[#allocation4] sm:$0xf]
    %v136 = vld [vmem:[#allocation4 + $0x4] sm:$0xf]
    %v137 = vld [vmem:[#allocation4 + $0x8] sm:$0xf]
    %v138 = vld [vmem:[#allocation4 + $0xc] sm:$0xf]
    %v139 = vld [vmem:[#allocation4 + $0x10] sm:$0xf]
    %v140 = vld [vmem:[#allocation4 + $0x14] sm:$0xf]
    %v141 = vld [vmem:[#allocation4 + $0x18] sm:$0xf]
    %v142 = vld [vmem:[#allocation4 + $0x1c] sm:$0xf]
    %v143 = vld [vmem:[#allocation4 + $0x20] sm:$0xf]
    %v144 = vld [vmem:[#allocation4 + $0x24] sm:$0xf]
    %v145 = vld [vmem:[#allocation4 + $0x28] sm:$0xf]
    %v146 = vld [vmem:[#allocation4 + $0x2c] sm:$0xf]
    %v147 = vld [vmem:[#allocation4 + $0x30] sm:$0xf]
    %v148 = vld [vmem:[#allocation4 + $0x34] sm:$0xf]
    %v149 = vld [vmem:[#allocation4 + $0x38] sm:$0xf]
    %v150 = vld [vmem:[#allocation4 + $0x3c] sm:$0xf]
    %v151 = vld [vmem:[#allocation4 + $0x40] sm:$0xf]
    %v152 = vld [vmem:[#allocation4 + $0x44] sm:$0xf]
    %v153 = vld [vmem:[#allocation4 + $0x48] sm:$0xf]
    %v154 = vld [vmem:[#allocation4 + $0x4c] sm:$0xf]
    %v155 = vld [vmem:[#allocation4 + $0x50] sm:$0xf]
    %v156 = vld [vmem:[#allocation4 + $0x54] sm:$0xf]
    %v157 = vld [vmem:[#allocation4 + $0x58] sm:$0xf]
    %v158 = vld [vmem:[#allocation4 + $0x5c] sm:$0xf]
    %v159 = vld [vmem:[#allocation4 + $0x60] sm:$0xf]
    %v160 = vld [vmem:[#allocation4 + $0x64] sm:$0xf]
    %v161 = vld [vmem:[#allocation4 + $0x68] sm:$0xf]
    %v162 = vld [vmem:[#allocation4 + $0x6c] sm:$0xf]
    %v163 = vld [vmem:[#allocation4 + $0x70] sm:$0xf]
    %v164 = vld [vmem:[#allocation4 + $0x74] sm:$0xf]
    %v165 = vld [vmem:[#allocation4 + $0x78] sm:$0xf]
    %v166 = vld [vmem:[#allocation4 + $0x7c] sm:$0xf]
    %v167 = vld [vmem:[#allocation4 + $0x80] sm:$0xf]
    %v168 = vld [vmem:[#allocation4 + $0x84] sm:$0xf]
    %v169 = vld [vmem:[#allocation4 + $0x88] sm:$0xf]
    %v170 = vld [vmem:[#allocation4 + $0x8c] sm:$0xf]
    %v171 = vld [vmem:[#allocation4 + $0x90] sm:$0xf]
    %v172 = vld [vmem:[#allocation4 + $0x94] sm:$0xf]
    %v173 = vld [vmem:[#allocation4 + $0x98] sm:$0xf]
    %v174 = vld [vmem:[#allocation4 + $0x9c] sm:$0xf]
    %v175 = vld [vmem:[#allocation4 + $0xa0] sm:$0xf]
    %v176 = vld [vmem:[#allocation4 + $0xa4] sm:$0xf]
    %v177 = vld [vmem:[#allocation4 + $0xa8] sm:$0xf]
    %v178 = vld [vmem:[#allocation4 + $0xac] sm:$0xf]
    %v179 = vld [vmem:[#allocation4 + $0xb0] sm:$0xf]
    %v180 = vld [vmem:[#allocation4 + $0xb4] sm:$0xf]
    %v181 = vld [vmem:[#allocation4 + $0xb8] sm:$0xf]
    %v182 = vld [vmem:[#allocation4 + $0xbc] sm:$0xf]
    %v183 = vld [vmem:[%s2] sm:$0x1]
    %v184 = vld [vmem:[#allocation2] sm:$0xf]
    %v185 = vld [vmem:[#allocation2 + $0x4] sm:$0xf]
    %v186 = vld [vmem:[#allocation2 + $0xc] sm:$0xf]
    %v187 = vld [vmem:[#allocation2 + $0x10] sm:$0xf]
    %v188 = vld [vmem:[#allocation2 + $0x8] sm:$0x1]
    %v189 = vld [vmem:[#allocation2 + $0x14] sm:$0x1]
    %v190 = vld [vmem:[#allocation2] sm:$0xe]
    %v191 = vld [vmem:[#allocation2 + $0xc] sm:$0xe]
    %v196 = vunpack.c.l.b16 %v184
    %v197 = vunpack.c.l.b16 %v185
    %v198 = vunpack.c.l.b16 %v186
    %v199 = vunpack.c.l.b16 %v187
    %v200 = vpack.c.b16 %v197, %v196
    %v201 = vpack.c.b16 %v199, %v198
    %v206 = vunpack.c.l.b16 %v188
    %v207 = vunpack.c.l.b16 %v189
    %v208 = vpack.c.b16 %v206, %v206
    %v209 = vpack.c.b16 %v207, %v207
    %vm210 = vsmask.f32 7424
    %v212 = vshrl.u32 %v200, 16
    %v214 = vshll.u32 %v200, 16
    %v216 = vrot.slane %v214, 1
    %v217 = vor.u32 %v212, %v216
    %v219 = vshll.u32 %v208, 16
    %v221 = vrot.slane %v219, 1
    %v222 = vsel %vm210, %v217, %v221
    %v224 = vshrl.u32 %v201, 16
    %v226 = vshll.u32 %v201, 16
    %v228 = vrot.slane %v226, 1
    %v229 = vor.u32 %v224, %v228
    %v231 = vshll.u32 %v209, 16
    %v233 = vrot.slane %v231, 1
    %v234 = vsel %vm210, %v229, %v233
    %v239 = vunpack.c.l.b16 %v190
    %v240 = vunpack.c.l.b16 %v191
    %v241 = vpack.c.b16 %v197, %v239
    %v242 = vpack.c.b16 %v199, %v240
    %vm243 = vcmask 1046528
    %v244 = vrot.slane %v241, 1
    %v245 = vrot.slane %v208, 1
    %v246 = vsel %vm243, %v244, %v245
    %v247 = vrot.slane %v242, 1
    %v248 = vrot.slane %v209, 1
    %v249 = vsel %vm243, %v247, %v248
    %v253 = vlaneseq
    %v254 = vshrl.u32 %v253, 7
    %v255 = vsub.s32 0, %v254
    %v256 = vrot.slane %v183, %v255
    %v306 = vunpack.c.l.b16 %v135
    %v307 = vunpack.c.l.b16 %v136
    %v308 = vunpack.c.l.b16 %v137
    %v309 = vunpack.c.l.b16 %v138
    %v310 = vunpack.c.l.b16 %v139
    %v311 = vunpack.c.l.b16 %v140
    %v312 = vunpack.c.l.b16 %v141
    %v313 = vunpack.c.l.b16 %v142
    %v314 = vunpack.c.l.b16 %v143
    %v315 = vunpack.c.l.b16 %v144
    %v316 = vunpack.c.l.b16 %v145
    %v317 = vunpack.c.l.b16 %v146
    %v318 = vunpack.c.l.b16 %v147
    %v319 = vunpack.c.l.b16 %v148
    %v320 = vunpack.c.l.b16 %v149
    %v321 = vunpack.c.l.b16 %v150
    %v322 = vunpack.c.l.b16 %v151
    %v323 = vunpack.c.l.b16 %v152
    %v324 = vunpack.c.l.b16 %v153
    %v325 = vunpack.c.l.b16 %v154
    %v326 = vunpack.c.l.b16 %v155
    %v327 = vunpack.c.l.b16 %v156
    %v328 = vunpack.c.l.b16 %v157
    %v329 = vunpack.c.l.b16 %v158
    %v330 = vunpack.c.l.b16 %v159
    %v331 = vunpack.c.l.b16 %v160
    %v332 = vunpack.c.l.b16 %v161
    %v333 = vunpack.c.l.b16 %v162
    %v334 = vunpack.c.l.b16 %v163
    %v335 = vunpack.c.l.b16 %v164
    %v336 = vunpack.c.l.b16 %v165
    %v337 = vunpack.c.l.b16 %v166
    %v338 = vunpack.c.l.b16 %v167
    %v339 = vunpack.c.l.b16 %v168
    %v340 = vunpack.c.l.b16 %v169
    %v341 = vunpack.c.l.b16 %v170
    %v342 = vunpack.c.l.b16 %v171
    %v343 = vunpack.c.l.b16 %v172
    %v344 = vunpack.c.l.b16 %v173
    %v345 = vunpack.c.l.b16 %v174
    %v346 = vunpack.c.l.b16 %v175
    %v347 = vunpack.c.l.b16 %v176
    %v348 = vunpack.c.l.b16 %v177
    %v349 = vunpack.c.l.b16 %v178
    %v350 = vunpack.c.l.b16 %v179
    %v351 = vunpack.c.l.b16 %v180
    %v352 = vunpack.c.l.b16 %v181
    %v353 = vunpack.c.l.b16 %v182
    %v354 = vpack.c.b16 %v307, %v306
    %v355 = vpack.c.b16 %v309, %v308
    %v356 = vpack.c.b16 %v311, %v310
    %v357 = vpack.c.b16 %v313, %v312
    %v358 = vpack.c.b16 %v315, %v314
    %v359 = vpack.c.b16 %v317, %v316
    %v360 = vpack.c.b16 %v319, %v318
    %v361 = vpack.c.b16 %v321, %v320
    %v362 = vpack.c.b16 %v323, %v322
    %v363 = vpack.c.b16 %v325, %v324
    %v364 = vpack.c.b16 %v327, %v326
    %v365 = vpack.c.b16 %v329, %v328
    %v366 = vpack.c.b16 %v331, %v330
    %v367 = vpack.c.b16 %v333, %v332
    %v368 = vpack.c.b16 %v335, %v334
    %v369 = vpack.c.b16 %v337, %v336
    %v370 = vpack.c.b16 %v339, %v338
    %v371 = vpack.c.b16 %v341, %v340
    %v372 = vpack.c.b16 %v343, %v342
    %v373 = vpack.c.b16 %v345, %v344
    %v374 = vpack.c.b16 %v347, %v346
    %v375 = vpack.c.b16 %v349, %v348
    %v376 = vpack.c.b16 %v351, %v350
    %v377 = vpack.c.b16 %v353, %v352
    %402 = vmatprep.subr.bf16.mxu0 0
    %403 = vmatpush1.bf16.msra.mxu0 %v354
    %404 = vmatprep.subr.bf16.mxu0 0
    %405 = vmatpush1.bf16.msra.mxu0 %v355
    %406 = vmatprep.subr.bf16.mxu0 0
    %407 = vmatpush1.bf16.msra.mxu0 %v356
    %408 = vmatprep.subr.bf16.mxu0 0
    %409 = vmatpush1.bf16.msra.mxu0 %v357
    %410 = vmatprep.subr.bf16.mxu0 0
    %411 = vmatpush1.bf16.msra.mxu0 %v358
    %412 = vmatprep.subr.bf16.mxu0 0
    %413 = vmatpush1.bf16.msra.mxu0 %v359
    %414 = vmatprep.subr.bf16.mxu0 0
    %415 = vmatpush1.bf16.msra.mxu0 %v360
    %416 = vmatprep.subr.bf16.mxu0 0
    %417 = vmatpush1.bf16.msra.mxu0 %v361
    %418 = vmatprep.subr.bf16.mxu0 0
    %419 = vmatpush1.bf16.msra.mxu0 %v362
    %420 = vmatprep.subr.bf16.mxu0 0
    %421 = vmatpush1.bf16.msra.mxu0 %v363
    %422 = vmatprep.subr.bf16.mxu0 0
    %423 = vmatpush1.bf16.msra.mxu0 %v364
    %424 = vmatprep.subr.bf16.mxu0 0
    %425 = vmatpush1.bf16.msra.mxu0 %v365
    %426 = vmatprep.subr.bf16.mxu0 0
    %427 = vmatpush1.bf16.msra.mxu0 %v366
    %428 = vmatprep.subr.bf16.mxu0 0
    %429 = vmatpush1.bf16.msra.mxu0 %v367
    %430 = vmatprep.subr.bf16.mxu0 0
    %431 = vmatpush1.bf16.msra.mxu0 %v368
    %432 = vmatprep.subr.bf16.mxu0 0
    %433 = vmatpush1.bf16.msra.mxu0 %v369
    %434 = vmatprep.mubr.bf16.mxu0 %v222
    %435 = vmatmul.mubr.bf16.gmra.mrb[0].mxu0 %v200
    %v436 = vpop.f32.mrb[0].mxu0
    %v437 = vadd.f32 %v256, %v436
    %v438 = vpop.f32.mrb[0].mxu0
    %v439 = vpop.f32.mrb[0].mxu0
    %v440 = vadd.f32 %v256, %v439
    %v441 = vpop.f32.mrb[0].mxu0
    %442 = vmatprep.mubr.bf16.mxu0 %v234
    %443 = vmatmul.mubr.bf16.gmra.mrb[0].mxu0 %v201
    %v444 = vpop.f32.mrb[0].mxu0
    %v445 = vadd.f32 %v256, %v444
    %v446 = vpop.f32.mrb[0].mxu0
    %v447 = vpop.f32.mrb[0].mxu0
    %v448 = vadd.f32 %v256, %v447
    %v449 = vpop.f32.mrb[0].mxu0
    %450 = vdwg.mxu0
    %451 = vmatprep.subr.bf16.mxu0 0
    %452 = vmatpush1.bf16.msra.mxu0 %v370
    %453 = vmatprep.subr.bf16.mxu0 0
    %454 = vmatpush1.bf16.msra.mxu0 %v371
    %455 = vmatprep.subr.bf16.mxu0 0
    %456 = vmatpush1.bf16.msra.mxu0 %v372
    %457 = vmatprep.subr.bf16.mxu0 0
    %458 = vmatpush1.bf16.msra.mxu0 %v373
    %459 = vmatprep.subr.bf16.mxu0 0
    %460 = vmatpush1.bf16.msra.mxu0 %v374
    %461 = vmatprep.subr.bf16.mxu0 0
    %462 = vmatpush1.bf16.msra.mxu0 %v375
    %463 = vmatprep.subr.bf16.mxu0 0
    %464 = vmatpush1.bf16.msra.mxu0 %v376
    %465 = vmatprep.subr.bf16.mxu0 0
    %466 = vmatpush1.bf16.msra.mxu0 %v377
    %467 = vmatprep.subr.bf16.mxu0 0
    %468 = vmatpush1.bf16.msra.mxu0 0
    %469 = vmatprep.subr.bf16.mxu0 0
    %470 = vmatpush1.bf16.msra.mxu0 0
    %471 = vmatprep.subr.bf16.mxu0 0
    %472 = vmatpush1.bf16.msra.mxu0 0
    %473 = vmatprep.subr.bf16.mxu0 0
    %474 = vmatpush1.bf16.msra.mxu0 0
    %475 = vmatprep.subr.bf16.mxu0 0
    %476 = vmatpush1.bf16.msra.mxu0 0
    %477 = vmatprep.subr.bf16.mxu0 0
    %478 = vmatpush1.bf16.msra.mxu0 0
    %479 = vmatprep.subr.bf16.mxu0 0
    %480 = vmatpush1.bf16.msra.mxu0 0
    %481 = vmatprep.subr.bf16.mxu0 0
    %482 = vmatpush1.bf16.msra.mxu0 0
    %483 = vmatprep.mubr.bf16.mxu0 0
    %484 = vmatmul.mubr.bf16.gmra.mrb[0].mxu0 %v246
    %v485 = vpop.f32.mrb[0].mxu0
    %v486 = vadd.f32 %v437, %v485
    %v487 = vpop.f32.mrb[0].mxu0
    %v488 = vpop.f32.mrb[0].mxu0
    %v489 = vadd.f32 %v440, %v488
    %v490 = vpop.f32.mrb[0].mxu0
    %491 = vmatprep.mubr.bf16.mxu0 0
    %492 = vmatmul.mubr.bf16.gmra.mrb[0].mxu0 %v249
    %v493 = vpop.f32.mrb[0].mxu0
    %v494 = vadd.f32 %v445, %v493
    %v495 = vpop.f32.mrb[0].mxu0
    %v496 = vpop.f32.mrb[0].mxu0
    %v497 = vadd.f32 %v448, %v496
    %v498 = vpop.f32.mrb[0].mxu0
    %499 = vdwg.mxu0
    %v500 = vmax.f32 %v486, 0.0
    %v501 = vmax.f32 %v489, 0.0
    %v502 = vmax.f32 %v494, 0.0
    %v503 = vmax.f32 %v497, 0.0
    %504 = vst [vmem:[#allocation3] sm:$0xff] %v500
    %505 = vst [vmem:[#allocation3 + $0x8] sm:$0xff] %v501
    %506 = vst [vmem:[#allocation3 + $0x10] sm:$0xff] %v502
    %507 = vst [vmem:[#allocation3 + $0x18] sm:$0xff] %v503
    %v508 = vld [vmem:[#allocation3] sm:$0xff]
    %v509 = vld [vmem:[#allocation3 + $0x8] sm:$0xff]
    %v510 = vld [vmem:[#allocation3 + $0x10] sm:$0xff]
    %v511 = vld [vmem:[#allocation3 + $0x18] sm:$0xff]
    %v512 = vpack.c.bf16 %v509, %v508
    %v513 = vpack.c.bf16 %v511, %v510
    %v516 = vunpack.c.l.b16 %v512
    %v517 = vunpack.c.h.b16 %v512
    %v518 = vunpack.c.l.b16 %v513
    %v519 = vunpack.c.h.b16 %v513
    %v520 = vpack.c.b16 %v516, %v516
    %v521 = vpack.c.b16 %v517, %v517
    %v522 = vpack.c.b16 %v518, %v518
    %v523 = vpack.c.b16 %v519, %v519
    %v525 = vshrl.u32 %v520, 16
    %v527 = vrot.slane %v525, 7
    %v528 = vshll.u32 %v520, 16
    %v530 = vor.u32 %v527, %v528
    %v531 = vrot.slane %v527, 4
    %v533 = vshrl.u32 %v521, 16
    %v535 = vrot.slane %v533, 7
    %v536 = vshll.u32 %v521, 16
    %v538 = vor.u32 %v535, %v536
    %v539 = vsel %vm78, %v531, %v538
    %v540 = vrot.slane %v535, 4
    %v542 = vshrl.u32 %v522, 16
    %v544 = vrot.slane %v542, 7
    %v545 = vshll.u32 %v522, 16
    %v547 = vor.u32 %v544, %v545
    %v548 = vrot.slane %v544, 4
    %v550 = vshrl.u32 %v523, 16
    %v552 = vrot.slane %v550, 7
    %v553 = vshll.u32 %v523, 16
    %v555 = vor.u32 %v552, %v553
    %v556 = vsel %vm78, %v548, %v555
    %v557 = vrot.slane %v552, 4
    %v564 = vld [vmem:[#allocation2] sm:$0xf]
    %v565 = vsel %vm120, %v530, %v564
    %566 = vst [vmem:[#allocation2] sm:$0xf] %v565
    %567 = vst [vmem:[#allocation2 + $0x4] sm:$0xf] %v539
    %v568 = vld [vmem:[#allocation2 + $0x8] sm:$0x1]
    %v569 = vsel %vm58, %v540, %v568
    %570 = vst [vmem:[#allocation2 + $0x8] sm:$0x1] %v569
    %v571 = vld [vmem:[#allocation2 + $0xc] sm:$0xf]
    %v572 = vsel %vm120, %v547, %v571
    %573 = vst [vmem:[#allocation2 + $0xc] sm:$0xf] %v572
    %574 = vst [vmem:[#allocation2 + $0x10] sm:$0xf] %v556
    %v575 = vld [vmem:[#allocation2 + $0x14] sm:$0x1]
    %v576 = vsel %vm58, %v557, %v575
    %577 = vst [vmem:[#allocation2 + $0x14] sm:$0x1] %v576
    %v578 = vld [vmem:[%s3] sm:$0xf]
    %v579 = vld [vmem:[%s3 + $0x4] sm:$0xf]
    %v580 = vld [vmem:[%s3 + $0x8] sm:$0xf]
    %v581 = vld [vmem:[%s3 + $0xc] sm:$0xf]
    %v582 = vld [vmem:[%s3 + $0x10] sm:$0xf]
    %v583 = vld [vmem:[%s3 + $0x14] sm:$0xf]
    %v584 = vld [vmem:[%s3 + $0x18] sm:$0xf]
    %v585 = vld [vmem:[%s3 + $0x1c] sm:$0xf]
    %v586 = vld [vmem:[%s3 + $0x20] sm:$0xf]
    %v587 = vld [vmem:[%s3 + $0x24] sm:$0xf]
    %v588 = vld [vmem:[%s3 + $0x28] sm:$0xf]
    %v589 = vld [vmem:[%s3 + $0x2c] sm:$0xf]
    %v590 = vld [vmem:[%s3 + $0x30] sm:$0xf]
    %v591 = vld [vmem:[%s3 + $0x34] sm:$0xf]
    %v592 = vld [vmem:[%s3 + $0x38] sm:$0xf]
    %v593 = vld [vmem:[%s3 + $0x3c] sm:$0xf]
    %v594 = vld [vmem:[%s3 + $0x40] sm:$0xf]
    %v595 = vld [vmem:[%s3 + $0x44] sm:$0xf]
    %v596 = vld [vmem:[%s3 + $0x48] sm:$0xf]
    %v597 = vld [vmem:[%s3 + $0x4c] sm:$0xf]
    %v598 = vld [vmem:[%s3 + $0x50] sm:$0xf]
    %v599 = vld [vmem:[%s3 + $0x54] sm:$0xf]
    %v600 = vld [vmem:[%s3 + $0x58] sm:$0xf]
    %v601 = vld [vmem:[%s3 + $0x5c] sm:$0xf]
    %v602 = vld [vmem:[%s3 + $0x60] sm:$0xf]
    %v603 = vld [vmem:[%s3 + $0x64] sm:$0xf]
    %v604 = vld [vmem:[%s3 + $0x68] sm:$0xf]
    %v605 = vld [vmem:[%s3 + $0x6c] sm:$0xf]
    %v606 = vld [vmem:[%s3 + $0x70] sm:$0xf]
    %v607 = vld [vmem:[%s3 + $0x74] sm:$0xf]
    %v608 = vld [vmem:[%s3 + $0x78] sm:$0xf]
    %v609 = vld [vmem:[%s3 + $0x7c] sm:$0xf]
    %v610 = vld [vmem:[%s3 + $0x80] sm:$0xf]
    %v611 = vld [vmem:[%s3 + $0x84] sm:$0xf]
    %v612 = vld [vmem:[%s3 + $0x88] sm:$0xf]
    %v613 = vld [vmem:[%s3 + $0x8c] sm:$0xf]
    %v614 = vld [vmem:[%s3 + $0x90] sm:$0xf]
    %v615 = vld [vmem:[%s3 + $0x94] sm:$0xf]
    %v616 = vld [vmem:[%s3 + $0x98] sm:$0xf]
    %v617 = vld [vmem:[%s3 + $0x9c] sm:$0xf]
    %v618 = vld [vmem:[%s3 + $0xa0] sm:$0xf]
    %v619 = vld [vmem:[%s3 + $0xa4] sm:$0xf]
    %v620 = vld [vmem:[%s3 + $0xa8] sm:$0xf]
    %v621 = vld [vmem:[%s3 + $0xac] sm:$0xf]
    %v622 = vld [vmem:[%s3 + $0xb0] sm:$0xf]
    %v623 = vld [vmem:[%s3 + $0xb4] sm:$0xf]
    %v624 = vld [vmem:[%s3 + $0xb8] sm:$0xf]
    %v625 = vld [vmem:[%s3 + $0xbc] sm:$0xf]
    %v626 = vld [vmem:[%s4] sm:$0x1]
    %v627 = vld [vmem:[#allocation2] sm:$0xf]
    %v628 = vld [vmem:[#allocation2 + $0x4] sm:$0xf]
    %v629 = vld [vmem:[#allocation2 + $0xc] sm:$0xf]
    %v630 = vld [vmem:[#allocation2 + $0x10] sm:$0xf]
    %v631 = vld [vmem:[#allocation2 + $0x8] sm:$0x1]
    %v632 = vld [vmem:[#allocation2 + $0x14] sm:$0x1]
    %v633 = vld [vmem:[#allocation2] sm:$0xe]
    %v634 = vld [vmem:[#allocation2 + $0xc] sm:$0xe]
    %v639 = vunpack.c.l.b16 %v627
    %v640 = vunpack.c.l.b16 %v628
    %v641 = vunpack.c.l.b16 %v629
    %v642 = vunpack.c.l.b16 %v630
    %v643 = vpack.c.b16 %v640, %v639
    %v644 = vpack.c.b16 %v642, %v641
    %v649 = vunpack.c.l.b16 %v631
    %v650 = vunpack.c.l.b16 %v632
    %v651 = vpack.c.b16 %v649, %v649
    %v652 = vpack.c.b16 %v650, %v650
    %v654 = vshrl.u32 %v643, 16
    %v656 = vshll.u32 %v643, 16
    %v658 = vrot.slane %v656, 1
    %v659 = vor.u32 %v654, %v658
    %v661 = vshll.u32 %v651, 16
    %v663 = vrot.slane %v661, 1
    %v664 = vsel %vm210, %v659, %v663
    %v666 = vshrl.u32 %v644, 16
    %v668 = vshll.u32 %v644, 16
    %v670 = vrot.slane %v668, 1
    %v671 = vor.u32 %v666, %v670
    %v673 = vshll.u32 %v652, 16
    %v675 = vrot.slane %v673, 1
    %v676 = vsel %vm210, %v671, %v675
    %v681 = vunpack.c.l.b16 %v633
    %v682 = vunpack.c.l.b16 %v634
    %v683 = vpack.c.b16 %v640, %v681
    %v684 = vpack.c.b16 %v642, %v682
    %v685 = vrot.slane %v683, 1
    %v686 = vrot.slane %v651, 1
    %v687 = vsel %vm243, %v685, %v686
    %v688 = vrot.slane %v684, 1
    %v689 = vrot.slane %v652, 1
    %v690 = vsel %vm243, %v688, %v689
    %v694 = vlaneseq
    %v695 = vshrl.u32 %v694, 7
    %v696 = vsub.s32 0, %v695
    %v697 = vrot.slane %v626, %v696
    %v747 = vunpack.c.l.b16 %v578
    %v748 = vunpack.c.l.b16 %v579
    %v749 = vunpack.c.l.b16 %v580
    %v750 = vunpack.c.l.b16 %v581
    %v751 = vunpack.c.l.b16 %v582
    %v752 = vunpack.c.l.b16 %v583
    %v753 = vunpack.c.l.b16 %v584
    %v754 = vunpack.c.l.b16 %v585
    %v755 = vunpack.c.l.b16 %v586
    %v756 = vunpack.c.l.b16 %v587
    %v757 = vunpack.c.l.b16 %v588
    %v758 = vunpack.c.l.b16 %v589
    %v759 = vunpack.c.l.b16 %v590
    %v760 = vunpack.c.l.b16 %v591
    %v761 = vunpack.c.l.b16 %v592
    %v762 = vunpack.c.l.b16 %v593
    %v763 = vunpack.c.l.b16 %v594
    %v764 = vunpack.c.l.b16 %v595
    %v765 = vunpack.c.l.b16 %v596
    %v766 = vunpack.c.l.b16 %v597
    %v767 = vunpack.c.l.b16 %v598
    %v768 = vunpack.c.l.b16 %v599
    %v769 = vunpack.c.l.b16 %v600
    %v770 = vunpack.c.l.b16 %v601
    %v771 = vunpack.c.l.b16 %v602
    %v772 = vunpack.c.l.b16 %v603
    %v773 = vunpack.c.l.b16 %v604
    %v774 = vunpack.c.l.b16 %v605
    %v775 = vunpack.c.l.b16 %v606
    %v776 = vunpack.c.l.b16 %v607
    %v777 = vunpack.c.l.b16 %v608
    %v778 = vunpack.c.l.b16 %v609
    %v779 = vunpack.c.l.b16 %v610
    %v780 = vunpack.c.l.b16 %v611
    %v781 = vunpack.c.l.b16 %v612
    %v782 = vunpack.c.l.b16 %v613
    %v783 = vunpack.c.l.b16 %v614
    %v784 = vunpack.c.l.b16 %v615
    %v785 = vunpack.c.l.b16 %v616
    %v786 = vunpack.c.l.b16 %v617
    %v787 = vunpack.c.l.b16 %v618
    %v788 = vunpack.c.l.b16 %v619
    %v789 = vunpack.c.l.b16 %v620
    %v790 = vunpack.c.l.b16 %v621
    %v791 = vunpack.c.l.b16 %v622
    %v792 = vunpack.c.l.b16 %v623
    %v793 = vunpack.c.l.b16 %v624
    %v794 = vunpack.c.l.b16 %v625
    %v795 = vpack.c.b16 %v748, %v747
    %v796 = vpack.c.b16 %v750, %v749
    %v797 = vpack.c.b16 %v752, %v751
    %v798 = vpack.c.b16 %v754, %v753
    %v799 = vpack.c.b16 %v756, %v755
    %v800 = vpack.c.b16 %v758, %v757
    %v801 = vpack.c.b16 %v760, %v759
    %v802 = vpack.c.b16 %v762, %v761
    %v803 = vpack.c.b16 %v764, %v763
    %v804 = vpack.c.b16 %v766, %v765
    %v805 = vpack.c.b16 %v768, %v767
    %v806 = vpack.c.b16 %v770, %v769
    %v807 = vpack.c.b16 %v772, %v771
    %v808 = vpack.c.b16 %v774, %v773
    %v809 = vpack.c.b16 %v776, %v775
    %v810 = vpack.c.b16 %v778, %v777
    %v811 = vpack.c.b16 %v780, %v779
    %v812 = vpack.c.b16 %v782, %v781
    %v813 = vpack.c.b16 %v784, %v783
    %v814 = vpack.c.b16 %v786, %v785
    %v815 = vpack.c.b16 %v788, %v787
    %v816 = vpack.c.b16 %v790, %v789
    %v817 = vpack.c.b16 %v792, %v791
    %v818 = vpack.c.b16 %v794, %v793
    %843 = vmatprep.subr.bf16.mxu0 0
    %844 = vmatpush1.bf16.msra.mxu0 %v795
    %845 = vmatprep.subr.bf16.mxu0 0
    %846 = vmatpush1.bf16.msra.mxu0 %v796
    %847 = vmatprep.subr.bf16.mxu0 0
    %848 = vmatpush1.bf16.msra.mxu0 %v797
    %849 = vmatprep.subr.bf16.mxu0 0
    %850 = vmatpush1.bf16.msra.mxu0 %v798
    %851 = vmatprep.subr.bf16.mxu0 0
    %852 = vmatpush1.bf16.msra.mxu0 %v799
    %853 = vmatprep.subr.bf16.mxu0 0
    %854 = vmatpush1.bf16.msra.mxu0 %v800
    %855 = vmatprep.subr.bf16.mxu0 0
    %856 = vmatpush1.bf16.msra.mxu0 %v801
    %857 = vmatprep.subr.bf16.mxu0 0
    %858 = vmatpush1.bf16.msra.mxu0 %v802
    %859 = vmatprep.subr.bf16.mxu0 0
    %860 = vmatpush1.bf16.msra.mxu0 %v803
    %861 = vmatprep.subr.bf16.mxu0 0
    %862 = vmatpush1.bf16.msra.mxu0 %v804
    %863 = vmatprep.subr.bf16.mxu0 0
    %864 = vmatpush1.bf16.msra.mxu0 %v805
    %865 = vmatprep.subr.bf16.mxu0 0
    %866 = vmatpush1.bf16.msra.mxu0 %v806
    %867 = vmatprep.subr.bf16.mxu0 0
    %868 = vmatpush1.bf16.msra.mxu0 %v807
    %869 = vmatprep.subr.bf16.mxu0 0
    %870 = vmatpush1.bf16.msra.mxu0 %v808
    %871 = vmatprep.subr.bf16.mxu0 0
    %872 = vmatpush1.bf16.msra.mxu0 %v809
    %873 = vmatprep.subr.bf16.mxu0 0
    %874 = vmatpush1.bf16.msra.mxu0 %v810
    %875 = vmatprep.mubr.bf16.mxu0 %v664
    %876 = vmatmul.mubr.bf16.gmra.mrb[0].mxu0 %v643
    %v877 = vpop.f32.mrb[0].mxu0
    %v878 = vadd.f32 %v697, %v877
    %v879 = vpop.f32.mrb[0].mxu0
    %v880 = vpop.f32.mrb[0].mxu0
    %v881 = vadd.f32 %v697, %v880
    %v882 = vpop.f32.mrb[0].mxu0
    %883 = vmatprep.mubr.bf16.mxu0 %v676
    %884 = vmatmul.mubr.bf16.gmra.mrb[0].mxu0 %v644
    %v885 = vpop.f32.mrb[0].mxu0
    %v886 = vadd.f32 %v697, %v885
    %v887 = vpop.f32.mrb[0].mxu0
    %v888 = vpop.f32.mrb[0].mxu0
    %v889 = vadd.f32 %v697, %v888
    %v890 = vpop.f32.mrb[0].mxu0
    %891 = vdwg.mxu0
    %892 = vmatprep.subr.bf16.mxu0 0
    %893 = vmatpush1.bf16.msra.mxu0 %v811
    %894 = vmatprep.subr.bf16.mxu0 0
    %895 = vmatpush1.bf16.msra.mxu0 %v812
    %896 = vmatprep.subr.bf16.mxu0 0
    %897 = vmatpush1.bf16.msra.mxu0 %v813
    %898 = vmatprep.subr.bf16.mxu0 0
    %899 = vmatpush1.bf16.msra.mxu0 %v814
    %900 = vmatprep.subr.bf16.mxu0 0
    %901 = vmatpush1.bf16.msra.mxu0 %v815
    %902 = vmatprep.subr.bf16.mxu0 0
    %903 = vmatpush1.bf16.msra.mxu0 %v816
    %904 = vmatprep.subr.bf16.mxu0 0
    %905 = vmatpush1.bf16.msra.mxu0 %v817
    %906 = vmatprep.subr.bf16.mxu0 0
    %907 = vmatpush1.bf16.msra.mxu0 %v818
    %908 = vmatprep.subr.bf16.mxu0 0
    %909 = vmatpush1.bf16.msra.mxu0 0
    %910 = vmatprep.subr.bf16.mxu0 0
    %911 = vmatpush1.bf16.msra.mxu0 0
    %912 = vmatprep.subr.bf16.mxu0 0
    %913 = vmatpush1.bf16.msra.mxu0 0
    %914 = vmatprep.subr.bf16.mxu0 0
    %915 = vmatpush1.bf16.msra.mxu0 0
    %916 = vmatprep.subr.bf16.mxu0 0
    %917 = vmatpush1.bf16.msra.mxu0 0
    %918 = vmatprep.subr.bf16.mxu0 0
    %919 = vmatpush1.bf16.msra.mxu0 0
    %920 = vmatprep.subr.bf16.mxu0 0
    %921 = vmatpush1.bf16.msra.mxu0 0
    %922 = vmatprep.subr.bf16.mxu0 0
    %923 = vmatpush1.bf16.msra.mxu0 0
    %924 = vmatprep.mubr.bf16.mxu0 0
    %925 = vmatmul.mubr.bf16.gmra.mrb[0].mxu0 %v687
    %v926 = vpop.f32.mrb[0].mxu0
    %v927 = vadd.f32 %v878, %v926
    %v928 = vpop.f32.mrb[0].mxu0
    %v929 = vpop.f32.mrb[0].mxu0
    %v930 = vadd.f32 %v881, %v929
    %v931 = vpop.f32.mrb[0].mxu0
    %932 = vmatprep.mubr.bf16.mxu0 0
    %933 = vmatmul.mubr.bf16.gmra.mrb[0].mxu0 %v690
    %v934 = vpop.f32.mrb[0].mxu0
    %v935 = vadd.f32 %v886, %v934
    %v936 = vpop.f32.mrb[0].mxu0
    %v937 = vpop.f32.mrb[0].mxu0
    %v938 = vadd.f32 %v889, %v937
    %v939 = vpop.f32.mrb[0].mxu0
    %940 = vdwg.mxu0
    %v941 = vmax.f32 %v927, 0.0
    %v942 = vmax.f32 %v930, 0.0
    %v943 = vmax.f32 %v935, 0.0
    %v944 = vmax.f32 %v938, 0.0
    %v945 = vld [vmem:[#allocation3] sm:$0xff]
    %v946 = vld [vmem:[#allocation3 + $0x8] sm:$0xff]
    %v947 = vld [vmem:[#allocation3 + $0x10] sm:$0xff]
    %v948 = vld [vmem:[#allocation3 + $0x18] sm:$0xff]
    %v949 = vmul.f32 %v941, 0.1
    %v950 = vmul.f32 %v942, 0.1
    %v951 = vmul.f32 %v943, 0.1
    %v952 = vmul.f32 %v944, 0.1
    %v953 = vadd.f32 %v945, %v949
    %v954 = vadd.f32 %v946, %v950
    %v955 = vadd.f32 %v947, %v951
    %v956 = vadd.f32 %v948, %v952
    %957 = vst [vmem:[#allocation3] sm:$0xff] %v953
    %958 = vst [vmem:[#allocation3 + $0x8] sm:$0xff] %v954
    %959 = vst [vmem:[#allocation3 + $0x10] sm:$0xff] %v955
    %960 = vst [vmem:[#allocation3 + $0x18] sm:$0xff] %v956
    %v961 = vld [vmem:[#allocation3] sm:$0xff]
    %v962 = vld [vmem:[#allocation3 + $0x8] sm:$0xff]
    %v963 = vld [vmem:[#allocation3 + $0x10] sm:$0xff]
    %v964 = vld [vmem:[#allocation3 + $0x18] sm:$0xff]
    %v965 = vpack.c.bf16 %v962, %v961
    %v966 = vpack.c.bf16 %v964, %v963
    %v969 = vunpack.c.l.b16 %v965
    %v970 = vunpack.c.h.b16 %v965
    %v971 = vunpack.c.l.b16 %v966
    %v972 = vunpack.c.h.b16 %v966
    %v973 = vpack.c.b16 %v969, %v969
    %v974 = vpack.c.b16 %v970, %v970
    %v975 = vpack.c.b16 %v971, %v971
    %v976 = vpack.c.b16 %v972, %v972
    %v978 = vshrl.u32 %v973, 16
    %v980 = vrot.slane %v978, 7
    %v981 = vshll.u32 %v973, 16
    %v983 = vor.u32 %v980, %v981
    %v984 = vrot.slane %v980, 4
    %v986 = vshrl.u32 %v974, 16
    %v988 = vrot.slane %v986, 7
    %v989 = vshll.u32 %v974, 16
    %v991 = vor.u32 %v988, %v989
    %v992 = vsel %vm78, %v984, %v991
    %v993 = vrot.slane %v988, 4
    %v995 = vshrl.u32 %v975, 16
    %v997 = vrot.slane %v995, 7
    %v998 = vshll.u32 %v975, 16
    %v1000 = vor.u32 %v997, %v998
    %v1001 = vrot.slane %v997, 4
    %v1003 = vshrl.u32 %v976, 16
    %v1005 = vrot.slane %v1003, 7
    %v1006 = vshll.u32 %v976, 16
    %v1008 = vor.u32 %v1005, %v1006
    %v1009 = vsel %vm78, %v1001, %v1008
    %v1010 = vrot.slane %v1005, 4
    %v1017 = vld [vmem:[#allocation2] sm:$0xf]
    %v1018 = vsel %vm120, %v983, %v1017
    %1019 = vst [vmem:[#allocation2] sm:$0xf] %v1018
    %1020 = vst [vmem:[#allocation2 + $0x4] sm:$0xf] %v992
    %v1021 = vld [vmem:[#allocation2 + $0x8] sm:$0x1]
    %v1022 = vsel %vm58, %v993, %v1021
    %1023 = vst [vmem:[#allocation2 + $0x8] sm:$0x1] %v1022
    %v1024 = vld [vmem:[#allocation2 + $0xc] sm:$0xf]
    %v1025 = vsel %vm120, %v1000, %v1024
    %1026 = vst [vmem:[#allocation2 + $0xc] sm:$0xf] %v1025
    %1027 = vst [vmem:[#allocation2 + $0x10] sm:$0xf] %v1009
    %v1028 = vld [vmem:[#allocation2 + $0x14] sm:$0x1]
    %v1029 = vsel %vm58, %v1010, %v1028
    %1030 = vst [vmem:[#allocation2 + $0x14] sm:$0x1] %v1029
    %s1031 = scalar_lea.vmem %s3, 192
    %v1032 = vld [vmem:[%s1031] sm:$0xf]
    %v1033 = vld [vmem:[%s1031 + $0x4] sm:$0xf]
    %v1034 = vld [vmem:[%s1031 + $0x8] sm:$0xf]
    %v1035 = vld [vmem:[%s1031 + $0xc] sm:$0xf]
    %v1036 = vld [vmem:[%s1031 + $0x10] sm:$0xf]
    %v1037 = vld [vmem:[%s1031 + $0x14] sm:$0xf]
    %v1038 = vld [vmem:[%s1031 + $0x18] sm:$0xf]
    %v1039 = vld [vmem:[%s1031 + $0x1c] sm:$0xf]
    %v1040 = vld [vmem:[%s1031 + $0x20] sm:$0xf]
    %v1041 = vld [vmem:[%s1031 + $0x24] sm:$0xf]
    %v1042 = vld [vmem:[%s1031 + $0x28] sm:$0xf]
    %v1043 = vld [vmem:[%s1031 + $0x2c] sm:$0xf]
    %v1044 = vld [vmem:[%s1031 + $0x30] sm:$0xf]
    %v1045 = vld [vmem:[%s1031 + $0x34] sm:$0xf]
    %v1046 = vld [vmem:[%s1031 + $0x38] sm:$0xf]
    %v1047 = vld [vmem:[%s1031 + $0x3c] sm:$0xf]
    %v1048 = vld [vmem:[%s1031 + $0x40] sm:$0xf]
    %v1049 = vld [vmem:[%s1031 + $0x44] sm:$0xf]
    %v1050 = vld [vmem:[%s1031 + $0x48] sm:$0xf]
    %v1051 = vld [vmem:[%s1031 + $0x4c] sm:$0xf]
    %v1052 = vld [vmem:[%s1031 + $0x50] sm:$0xf]
    %v1053 = vld [vmem:[%s1031 + $0x54] sm:$0xf]
    %v1054 = vld [vmem:[%s1031 + $0x58] sm:$0xf]
    %v1055 = vld [vmem:[%s1031 + $0x5c] sm:$0xf]
    %v1056 = vld [vmem:[%s1031 + $0x60] sm:$0xf]
    %v1057 = vld [vmem:[%s1031 + $0x64] sm:$0xf]
    %v1058 = vld [vmem:[%s1031 + $0x68] sm:$0xf]
    %v1059 = vld [vmem:[%s1031 + $0x6c] sm:$0xf]
    %v1060 = vld [vmem:[%s1031 + $0x70] sm:$0xf]
    %v1061 = vld [vmem:[%s1031 + $0x74] sm:$0xf]
    %v1062 = vld [vmem:[%s1031 + $0x78] sm:$0xf]
    %v1063 = vld [vmem:[%s1031 + $0x7c] sm:$0xf]
    %v1064 = vld [vmem:[%s1031 + $0x80] sm:$0xf]
    %v1065 = vld [vmem:[%s1031 + $0x84] sm:$0xf]
    %v1066 = vld [vmem:[%s1031 + $0x88] sm:$0xf]
    %v1067 = vld [vmem:[%s1031 + $0x8c] sm:$0xf]
    %v1068 = vld [vmem:[%s1031 + $0x90] sm:$0xf]
    %v1069 = vld [vmem:[%s1031 + $0x94] sm:$0xf]
    %v1070 = vld [vmem:[%s1031 + $0x98] sm:$0xf]
    %v1071 = vld [vmem:[%s1031 + $0x9c] sm:$0xf]
    %v1072 = vld [vmem:[%s1031 + $0xa0] sm:$0xf]
    %v1073 = vld [vmem:[%s1031 + $0xa4] sm:$0xf]
    %v1074 = vld [vmem:[%s1031 + $0xa8] sm:$0xf]
    %v1075 = vld [vmem:[%s1031 + $0xac] sm:$0xf]
    %v1076 = vld [vmem:[%s1031 + $0xb0] sm:$0xf]
    %v1077 = vld [vmem:[%s1031 + $0xb4] sm:$0xf]
    %v1078 = vld [vmem:[%s1031 + $0xb8] sm:$0xf]
    %v1079 = vld [vmem:[%s1031 + $0xbc] sm:$0xf]
    %s1080 = scalar_lea.vmem %s4, 1
    %v1081 = vld [vmem:[%s1080] sm:$0x1]
    %v1082 = vld [vmem:[#allocation2] sm:$0xf]
    %v1083 = vld [vmem:[#allocation2 + $0x4] sm:$0xf]
    %v1084 = vld [vmem:[#allocation2 + $0xc] sm:$0xf]
    %v1085 = vld [vmem:[#allocation2 + $0x10] sm:$0xf]
    %v1086 = vld [vmem:[#allocation2 + $0x8] sm:$0x1]
    %v1087 = vld [vmem:[#allocation2 + $0x14] sm:$0x1]
    %v1088 = vld [vmem:[#allocation2] sm:$0xe]
    %v1089 = vld [vmem:[#allocation2 + $0xc] sm:$0xe]
    %v1094 = vunpack.c.l.b16 %v1082
    %v1095 = vunpack.c.l.b16 %v1083
    %v1096 = vunpack.c.l.b16 %v1084
    %v1097 = vunpack.c.l.b16 %v1085
    %v1098 = vpack.c.b16 %v1095, %v1094
    %v1099 = vpack.c.b16 %v1097, %v1096
    %v1104 = vunpack.c.l.b16 %v1086
    %v1105 = vunpack.c.l.b16 %v1087
    %v1106 = vpack.c.b16 %v1104, %v1104
    %v1107 = vpack.c.b16 %v1105, %v1105
    %v1109 = vshrl.u32 %v1098, 16
    %v1111 = vshll.u32 %v1098, 16
    %v1113 = vrot.slane %v1111, 1
    %v1114 = vor.u32 %v1109, %v1113
    %v1116 = vshll.u32 %v1106, 16
    %v1118 = vrot.slane %v1116, 1
    %v1119 = vsel %vm210, %v1114, %v1118
    %v1121 = vshrl.u32 %v1099, 16
    %v1123 = vshll.u32 %v1099, 16
    %v1125 = vrot.slane %v1123, 1
    %v1126 = vor.u32 %v1121, %v1125
    %v1128 = vshll.u32 %v1107, 16
    %v1130 = vrot.slane %v1128, 1
    %v1131 = vsel %vm210, %v1126, %v1130
    %v1136 = vunpack.c.l.b16 %v1088
    %v1137 = vunpack.c.l.b16 %v1089
    %v1138 = vpack.c.b16 %v1095, %v1136
    %v1139 = vpack.c.b16 %v1097, %v1137
    %v1140 = vrot.slane %v1138, 1
    %v1141 = vrot.slane %v1106, 1
    %v1142 = vsel %vm243, %v1140, %v1141
    %v1143 = vrot.slane %v1139, 1
    %v1144 = vrot.slane %v1107, 1
    %v1145 = vsel %vm243, %v1143, %v1144
    %v1149 = vlaneseq
    %v1150 = vshrl.u32 %v1149, 7
    %v1151 = vsub.s32 0, %v1150
    %v1152 = vrot.slane %v1081, %v1151
    %v1202 = vunpack.c.l.b16 %v1032
    %v1203 = vunpack.c.l.b16 %v1033
    %v1204 = vunpack.c.l.b16 %v1034
    %v1205 = vunpack.c.l.b16 %v1035
    %v1206 = vunpack.c.l.b16 %v1036
    %v1207 = vunpack.c.l.b16 %v1037
    %v1208 = vunpack.c.l.b16 %v1038
    %v1209 = vunpack.c.l.b16 %v1039
    %v1210 = vunpack.c.l.b16 %v1040
    %v1211 = vunpack.c.l.b16 %v1041
    %v1212 = vunpack.c.l.b16 %v1042
    %v1213 = vunpack.c.l.b16 %v1043
    %v1214 = vunpack.c.l.b16 %v1044
    %v1215 = vunpack.c.l.b16 %v1045
    %v1216 = vunpack.c.l.b16 %v1046
    %v1217 = vunpack.c.l.b16 %v1047
    %v1218 = vunpack.c.l.b16 %v1048
    %v1219 = vunpack.c.l.b16 %v1049
    %v1220 = vunpack.c.l.b16 %v1050
    %v1221 = vunpack.c.l.b16 %v1051
    %v1222 = vunpack.c.l.b16 %v1052
    %v1223 = vunpack.c.l.b16 %v1053
    %v1224 = vunpack.c.l.b16 %v1054
    %v1225 = vunpack.c.l.b16 %v1055
    %v1226 = vunpack.c.l.b16 %v1056
    %v1227 = vunpack.c.l.b16 %v1057
    %v1228 = vunpack.c.l.b16 %v1058
    %v1229 = vunpack.c.l.b16 %v1059
    %v1230 = vunpack.c.l.b16 %v1060
    %v1231 = vunpack.c.l.b16 %v1061
    %v1232 = vunpack.c.l.b16 %v1062
    %v1233 = vunpack.c.l.b16 %v1063
    %v1234 = vunpack.c.l.b16 %v1064
    %v1235 = vunpack.c.l.b16 %v1065
    %v1236 = vunpack.c.l.b16 %v1066
    %v1237 = vunpack.c.l.b16 %v1067
    %v1238 = vunpack.c.l.b16 %v1068
    %v1239 = vunpack.c.l.b16 %v1069
    %v1240 = vunpack.c.l.b16 %v1070
    %v1241 = vunpack.c.l.b16 %v1071
    %v1242 = vunpack.c.l.b16 %v1072
    %v1243 = vunpack.c.l.b16 %v1073
    %v1244 = vunpack.c.l.b16 %v1074
    %v1245 = vunpack.c.l.b16 %v1075
    %v1246 = vunpack.c.l.b16 %v1076
    %v1247 = vunpack.c.l.b16 %v1077
    %v1248 = vunpack.c.l.b16 %v1078
    %v1249 = vunpack.c.l.b16 %v1079
    %v1250 = vpack.c.b16 %v1203, %v1202
    %v1251 = vpack.c.b16 %v1205, %v1204
    %v1252 = vpack.c.b16 %v1207, %v1206
    %v1253 = vpack.c.b16 %v1209, %v1208
    %v1254 = vpack.c.b16 %v1211, %v1210
    %v1255 = vpack.c.b16 %v1213, %v1212
    %v1256 = vpack.c.b16 %v1215, %v1214
    %v1257 = vpack.c.b16 %v1217, %v1216
    %v1258 = vpack.c.b16 %v1219, %v1218
    %v1259 = vpack.c.b16 %v1221, %v1220
    %v1260 = vpack.c.b16 %v1223, %v1222
    %v1261 = vpack.c.b16 %v1225, %v1224
    %v1262 = vpack.c.b16 %v1227, %v1226
    %v1263 = vpack.c.b16 %v1229, %v1228
    %v1264 = vpack.c.b16 %v1231, %v1230
    %v1265 = vpack.c.b16 %v1233, %v1232
    %v1266 = vpack.c.b16 %v1235, %v1234
    %v1267 = vpack.c.b16 %v1237, %v1236
    %v1268 = vpack.c.b16 %v1239, %v1238
    %v1269 = vpack.c.b16 %v1241, %v1240
    %v1270 = vpack.c.b16 %v1243, %v1242
    %v1271 = vpack.c.b16 %v1245, %v1244
    %v1272 = vpack.c.b16 %v1247, %v1246
    %v1273 = vpack.c.b16 %v1249, %v1248
    %1298 = vmatprep.subr.bf16.mxu0 0
    %1299 = vmatpush1.bf16.msra.mxu0 %v1250
    %1300 = vmatprep.subr.bf16.mxu0 0
    %1301 = vmatpush1.bf16.msra.mxu0 %v1251
    %1302 = vmatprep.subr.bf16.mxu0 0
    %1303 = vmatpush1.bf16.msra.mxu0 %v1252
    %1304 = vmatprep.subr.bf16.mxu0 0
    %1305 = vmatpush1.bf16.msra.mxu0 %v1253
    %1306 = vmatprep.subr.bf16.mxu0 0
    %1307 = vmatpush1.bf16.msra.mxu0 %v1254
    %1308 = vmatprep.subr.bf16.mxu0 0
    %1309 = vmatpush1.bf16.msra.mxu0 %v1255
    %1310 = vmatprep.subr.bf16.mxu0 0
    %1311 = vmatpush1.bf16.msra.mxu0 %v1256
    %1312 = vmatprep.subr.bf16.mxu0 0
    %1313 = vmatpush1.bf16.msra.mxu0 %v1257
    %1314 = vmatprep.subr.bf16.mxu0 0
    %1315 = vmatpush1.bf16.msra.mxu0 %v1258
    %1316 = vmatprep.subr.bf16.mxu0 0
    %1317 = vmatpush1.bf16.msra.mxu0 %v1259
    %1318 = vmatprep.subr.bf16.mxu0 0
    %1319 = vmatpush1.bf16.msra.mxu0 %v1260
    %1320 = vmatprep.subr.bf16.mxu0 0
    %1321 = vmatpush1.bf16.msra.mxu0 %v1261
    %1322 = vmatprep.subr.bf16.mxu0 0
    %1323 = vmatpush1.bf16.msra.mxu0 %v1262
    %1324 = vmatprep.subr.bf16.mxu0 0
    %1325 = vmatpush1.bf16.msra.mxu0 %v1263
    %1326 = vmatprep.subr.bf16.mxu0 0
    %1327 = vmatpush1.bf16.msra.mxu0 %v1264
    %1328 = vmatprep.subr.bf16.mxu0 0
    %1329 = vmatpush1.bf16.msra.mxu0 %v1265
    %1330 = vmatprep.mubr.bf16.mxu0 %v1119
    %1331 = vmatmul.mubr.bf16.gmra.mrb[0].mxu0 %v1098
    %v1332 = vpop.f32.mrb[0].mxu0
    %v1333 = vadd.f32 %v1152, %v1332
    %v1334 = vpop.f32.mrb[0].mxu0
    %v1335 = vpop.f32.mrb[0].mxu0
    %v1336 = vadd.f32 %v1152, %v1335
    %v1337 = vpop.f32.mrb[0].mxu0
    %1338 = vmatprep.mubr.bf16.mxu0 %v1131
    %1339 = vmatmul.mubr.bf16.gmra.mrb[0].mxu0 %v1099
    %v1340 = vpop.f32.mrb[0].mxu0
    %v1341 = vadd.f32 %v1152, %v1340
    %v1342 = vpop.f32.mrb[0].mxu0
    %v1343 = vpop.f32.mrb[0].mxu0
    %v1344 = vadd.f32 %v1152, %v1343
    %v1345 = vpop.f32.mrb[0].mxu0
    %1346 = vdwg.mxu0
    %1347 = vmatprep.subr.bf16.mxu0 0
    %1348 = vmatpush1.bf16.msra.mxu0 %v1266
    %1349 = vmatprep.subr.bf16.mxu0 0
    %1350 = vmatpush1.bf16.msra.mxu0 %v1267
    %1351 = vmatprep.subr.bf16.mxu0 0
    %1352 = vmatpush1.bf16.msra.mxu0 %v1268
    %1353 = vmatprep.subr.bf16.mxu0 0
    %1354 = vmatpush1.bf16.msra.mxu0 %v1269
    %1355 = vmatprep.subr.bf16.mxu0 0
    %1356 = vmatpush1.bf16.msra.mxu0 %v1270
    %1357 = vmatprep.subr.bf16.mxu0 0
    %1358 = vmatpush1.bf16.msra.mxu0 %v1271
    %1359 = vmatprep.subr.bf16.mxu0 0
    %1360 = vmatpush1.bf16.msra.mxu0 %v1272
    %1361 = vmatprep.subr.bf16.mxu0 0
    %1362 = vmatpush1.bf16.msra.mxu0 %v1273
    %1363 = vmatprep.subr.bf16.mxu0 0
    %1364 = vmatpush1.bf16.msra.mxu0 0
    %1365 = vmatprep.subr.bf16.mxu0 0
    %1366 = vmatpush1.bf16.msra.mxu0 0
    %1367 = vmatprep.subr.bf16.mxu0 0
    %1368 = vmatpush1.bf16.msra.mxu0 0
    %1369 = vmatprep.subr.bf16.mxu0 0
    %1370 = vmatpush1.bf16.msra.mxu0 0
    %1371 = vmatprep.subr.bf16.mxu0 0
    %1372 = vmatpush1.bf16.msra.mxu0 0
    %1373 = vmatprep.subr.bf16.mxu0 0
    %1374 = vmatpush1.bf16.msra.mxu0 0
    %1375 = vmatprep.subr.bf16.mxu0 0
    %1376 = vmatpush1.bf16.msra.mxu0 0
    %1377 = vmatprep.subr.bf16.mxu0 0
    %1378 = vmatpush1.bf16.msra.mxu0 0
    %1379 = vmatprep.mubr.bf16.mxu0 0
    %1380 = vmatmul.mubr.bf16.gmra.mrb[0].mxu0 %v1142
    %v1381 = vpop.f32.mrb[0].mxu0
    %v1382 = vadd.f32 %v1333, %v1381
    %v1383 = vpop.f32.mrb[0].mxu0
    %v1384 = vpop.f32.mrb[0].mxu0
    %v1385 = vadd.f32 %v1336, %v1384
    %v1386 = vpop.f32.mrb[0].mxu0
    %1387 = vmatprep.mubr.bf16.mxu0 0
    %1388 = vmatmul.mubr.bf16.gmra.mrb[0].mxu0 %v1145
    %v1389 = vpop.f32.mrb[0].mxu0
    %v1390 = vadd.f32 %v1341, %v1389
    %v1391 = vpop.f32.mrb[0].mxu0
    %v1392 = vpop.f32.mrb[0].mxu0
    %v1393 = vadd.f32 %v1344, %v1392
    %v1394 = vpop.f32.mrb[0].mxu0
    %1395 = vdwg.mxu0
    %v1396 = vmax.f32 %v1382, 0.0
    %v1397 = vmax.f32 %v1385, 0.0
    %v1398 = vmax.f32 %v1390, 0.0
    %v1399 = vmax.f32 %v1393, 0.0
    %v1400 = vld [vmem:[#allocation3] sm:$0xff]
    %v1401 = vld [vmem:[#allocation3 + $0x8] sm:$0xff]
    %v1402 = vld [vmem:[#allocation3 + $0x10] sm:$0xff]
    %v1403 = vld [vmem:[#allocation3 + $0x18] sm:$0xff]
    %v1404 = vmul.f32 %v1396, 0.1
    %v1405 = vmul.f32 %v1397, 0.1
    %v1406 = vmul.f32 %v1398, 0.1
    %v1407 = vmul.f32 %v1399, 0.1
    %v1408 = vadd.f32 %v1400, %v1404
    %v1409 = vadd.f32 %v1401, %v1405
    %v1410 = vadd.f32 %v1402, %v1406
    %v1411 = vadd.f32 %v1403, %v1407
    %1412 = vst [vmem:[#allocation3] sm:$0xff] %v1408
    %1413 = vst [vmem:[#allocation3 + $0x8] sm:$0xff] %v1409
    %1414 = vst [vmem:[#allocation3 + $0x10] sm:$0xff] %v1410
    %1415 = vst [vmem:[#allocation3 + $0x18] sm:$0xff] %v1411
    %v1416 = vld [vmem:[#allocation3] sm:$0x1]
    %v1417 = vld [vmem:[#allocation3 + $0x10] sm:$0x1]
    %v1418 = vld [vmem:[#allocation3 + $0x1] sm:$0x1]
    %v1419 = vld [vmem:[#allocation3 + $0x11] sm:$0x1]
    %v1420 = vld [vmem:[#allocation3 + $0x2] sm:$0x1]
    %v1421 = vld [vmem:[#allocation3 + $0x12] sm:$0x1]
    %v1422 = vld [vmem:[#allocation3 + $0x3] sm:$0x1]
    %v1423 = vld [vmem:[#allocation3 + $0x13] sm:$0x1]
    %v1424 = vld [vmem:[#allocation3 + $0x4] sm:$0x1]
    %v1425 = vld [vmem:[#allocation3 + $0x14] sm:$0x1]
    %v1426 = vld [vmem:[#allocation3 + $0x5] sm:$0x1]
    %v1427 = vld [vmem:[#allocation3 + $0x15] sm:$0x1]
    %v1428 = vld [vmem:[#allocation3 + $0x6] sm:$0x1]
    %v1429 = vld [vmem:[#allocation3 + $0x16] sm:$0x1]
    %v1430 = vld [vmem:[#allocation3 + $0x7] sm:$0x1]
    %v1431 = vld [vmem:[#allocation3 + $0x17] sm:$0x1]
    %v1432 = vld [vmem:[#allocation3 + $0x8] sm:$0x1]
    %v1433 = vld [vmem:[#allocation3 + $0x18] sm:$0x1]
    %v1434 = vld [vmem:[#allocation3 + $0x9] sm:$0x1]
    %v1435 = vld [vmem:[#allocation3 + $0x19] sm:$0x1]
    %v1436 = vld [vmem:[#allocation3 + $0xa] sm:$0x1]
    %v1437 = vld [vmem:[#allocation3 + $0x1a] sm:$0x1]
    %v1438 = vld [vmem:[#allocation3 + $0xb] sm:$0x1]
    %v1439 = vld [vmem:[#allocation3 + $0x1b] sm:$0x1]
    %v1440 = vld [vmem:[#allocation3 + $0xc] sm:$0x1]
    %v1441 = vld [vmem:[#allocation3 + $0x1c] sm:$0x1]
    %v1442 = vld [vmem:[#allocation3 + $0xd] sm:$0x1]
    %v1443 = vld [vmem:[#allocation3 + $0x1d] sm:$0x1]
    %v1444 = vld [vmem:[#allocation3 + $0xe] sm:$0x1]
    %v1445 = vld [vmem:[#allocation3 + $0x1e] sm:$0x1]
    %v1446 = vld [vmem:[#allocation3 + $0xf] sm:$0x1]
    %v1447 = vld [vmem:[#allocation3 + $0x1f] sm:$0x1]
    %v1450 = vrot.slane %v1417, 7
    %vm1451 = vcmask 1041409
    %v1452 = vsel %vm1451, %v1450, %v1416
    %v1456 = vrot.slane %v1419, 7
    %v1457 = vsel %vm1451, %v1456, %v1418
    %v1461 = vrot.slane %v1421, 7
    %v1462 = vsel %vm1451, %v1461, %v1420
    %v1466 = vrot.slane %v1423, 7
    %v1467 = vsel %vm1451, %v1466, %v1422
    %v1471 = vrot.slane %v1425, 7
    %v1472 = vsel %vm1451, %v1471, %v1424
    %v1476 = vrot.slane %v1427, 7
    %v1477 = vsel %vm1451, %v1476, %v1426
    %v1481 = vrot.slane %v1429, 7
    %v1482 = vsel %vm1451, %v1481, %v1428
    %v1486 = vrot.slane %v1431, 7
    %v1487 = vsel %vm1451, %v1486, %v1430
    %v1491 = vrot.slane %v1433, 7
    %v1492 = vsel %vm1451, %v1491, %v1432
    %v1496 = vrot.slane %v1435, 7
    %v1497 = vsel %vm1451, %v1496, %v1434
    %v1501 = vrot.slane %v1437, 7
    %v1502 = vsel %vm1451, %v1501, %v1436
    %v1506 = vrot.slane %v1439, 7
    %v1507 = vsel %vm1451, %v1506, %v1438
    %v1511 = vrot.slane %v1441, 7
    %v1512 = vsel %vm1451, %v1511, %v1440
    %v1516 = vrot.slane %v1443, 7
    %v1517 = vsel %vm1451, %v1516, %v1442
    %v1521 = vrot.slane %v1445, 7
    %v1522 = vsel %vm1451, %v1521, %v1444
    %v1526 = vrot.slane %v1447, 7
    %v1527 = vsel %vm1451, %v1526, %v1446
    %v1529 = vpack.c.bf16 %v1452, %v1452
    %v1530 = vpack.c.bf16 %v1457, %v1457
    %v1531 = vpack.c.bf16 %v1462, %v1462
    %v1532 = vpack.c.bf16 %v1467, %v1467
    %v1533 = vpack.c.bf16 %v1472, %v1472
    %v1534 = vpack.c.bf16 %v1477, %v1477
    %v1535 = vpack.c.bf16 %v1482, %v1482
    %v1536 = vpack.c.bf16 %v1487, %v1487
    %v1537 = vpack.c.bf16 %v1492, %v1492
    %v1538 = vpack.c.bf16 %v1497, %v1497
    %v1539 = vpack.c.bf16 %v1502, %v1502
    %v1540 = vpack.c.bf16 %v1507, %v1507
    %v1541 = vpack.c.bf16 %v1512, %v1512
    %v1542 = vpack.c.bf16 %v1517, %v1517
    %v1543 = vpack.c.bf16 %v1522, %v1522
    %v1544 = vpack.c.bf16 %v1527, %v1527
    %v1545 = vld [vmem:[#allocation7] sm:$0xf]
    %v1546 = vld [vmem:[#allocation7 + $0x4] sm:$0xf]
    %v1547 = vld [vmem:[#allocation7 + $0x8] sm:$0xf]
    %v1548 = vld [vmem:[#allocation7 + $0xc] sm:$0xf]
    %v1549 = vld [vmem:[#allocation7 + $0x10] sm:$0xf]
    %v1550 = vld [vmem:[#allocation7 + $0x14] sm:$0xf]
    %v1551 = vld [vmem:[#allocation7 + $0x18] sm:$0xf]
    %v1552 = vld [vmem:[#allocation7 + $0x1c] sm:$0xf]
    %v1553 = vld [vmem:[#allocation7 + $0x20] sm:$0xf]
    %v1554 = vld [vmem:[#allocation7 + $0x24] sm:$0xf]
    %v1555 = vld [vmem:[#allocation7 + $0x28] sm:$0xf]
    %v1556 = vld [vmem:[#allocation7 + $0x2c] sm:$0xf]
    %v1557 = vld [vmem:[#allocation7 + $0x30] sm:$0xf]
    %v1558 = vld [vmem:[#allocation7 + $0x34] sm:$0xf]
    %v1559 = vld [vmem:[#allocation7 + $0x38] sm:$0xf]
    %v1560 = vld [vmem:[#allocation7 + $0x3c] sm:$0xf]
    %v1561 = vld [vmem:[#allocation7 + $0x40] sm:$0xf]
    %v1562 = vld [vmem:[#allocation7 + $0x44] sm:$0xf]
    %v1563 = vld [vmem:[#allocation7 + $0x48] sm:$0xf]
    %v1564 = vld [vmem:[#allocation7 + $0x4c] sm:$0xf]
    %v1565 = vld [vmem:[#allocation7 + $0x50] sm:$0xf]
    %v1566 = vld [vmem:[#allocation7 + $0x54] sm:$0xf]
    %v1567 = vld [vmem:[#allocation7 + $0x58] sm:$0xf]
    %v1568 = vld [vmem:[#allocation7 + $0x5c] sm:$0xf]
    %v1569 = vld [vmem:[#allocation7 + $0x60] sm:$0xf]
    %v1570 = vld [vmem:[#allocation7 + $0x64] sm:$0xf]
    %v1571 = vld [vmem:[#allocation7 + $0x68] sm:$0xf]
    %v1572 = vld [vmem:[#allocation7 + $0x6c] sm:$0xf]
    %v1573 = vld [vmem:[#allocation7 + $0x70] sm:$0xf]
    %v1574 = vld [vmem:[#allocation7 + $0x74] sm:$0xf]
    %v1575 = vld [vmem:[#allocation7 + $0x78] sm:$0xf]
    %v1576 = vld [vmem:[#allocation7 + $0x7c] sm:$0xf]
    %v1577 = vld [vmem:[#allocation7 + $0x80] sm:$0xf]
    %v1578 = vld [vmem:[#allocation7 + $0x84] sm:$0xf]
    %v1579 = vld [vmem:[#allocation7 + $0x88] sm:$0xf]
    %v1580 = vld [vmem:[#allocation7 + $0x8c] sm:$0xf]
    %v1581 = vld [vmem:[#allocation7 + $0x90] sm:$0xf]
    %v1582 = vld [vmem:[#allocation7 + $0x94] sm:$0xf]
    %v1583 = vld [vmem:[#allocation7 + $0x98] sm:$0xf]
    %v1584 = vld [vmem:[#allocation7 + $0x9c] sm:$0xf]
    %v1585 = vld [vmem:[#allocation7 + $0xa0] sm:$0xf]
    %v1586 = vld [vmem:[#allocation7 + $0xa4] sm:$0xf]
    %v1587 = vld [vmem:[#allocation7 + $0xa8] sm:$0xf]
    %v1588 = vld [vmem:[#allocation7 + $0xac] sm:$0xf]
    %v1589 = vld [vmem:[#allocation7 + $0xb0] sm:$0xf]
    %v1590 = vld [vmem:[#allocation7 + $0xb4] sm:$0xf]
    %v1591 = vld [vmem:[#allocation7 + $0xb8] sm:$0xf]
    %v1592 = vld [vmem:[#allocation7 + $0xbc] sm:$0xf]
    %v1593 = vld [vmem:[#allocation7 + $0xc0] sm:$0xf]
    %v1594 = vld [vmem:[#allocation7 + $0xc4] sm:$0xf]
    %v1595 = vld [vmem:[#allocation7 + $0xc8] sm:$0xf]
    %v1596 = vld [vmem:[#allocation7 + $0xcc] sm:$0xf]
    %v1597 = vld [vmem:[#allocation7 + $0xd0] sm:$0xf]
    %v1598 = vld [vmem:[#allocation7 + $0xd4] sm:$0xf]
    %v1599 = vld [vmem:[#allocation7 + $0xd8] sm:$0xf]
    %v1600 = vld [vmem:[#allocation7 + $0xdc] sm:$0xf]
    %v1601 = vld [vmem:[#allocation7 + $0xe0] sm:$0xf]
    %v1602 = vld [vmem:[#allocation7 + $0xe4] sm:$0xf]
    %v1603 = vld [vmem:[#allocation7 + $0xe8] sm:$0xf]
    %v1604 = vld [vmem:[#allocation7 + $0xec] sm:$0xf]
    %v1605 = vld [vmem:[#allocation7 + $0xf0] sm:$0xf]
    %v1606 = vld [vmem:[#allocation7 + $0xf4] sm:$0xf]
    %v1607 = vld [vmem:[#allocation7 + $0xf8] sm:$0xf]
    %v1608 = vld [vmem:[#allocation7 + $0xfc] sm:$0xf]
    %v1609 = vld [vmem:[#allocation7 + $0x100] sm:$0xf]
    %v1610 = vld [vmem:[#allocation7 + $0x104] sm:$0xf]
    %v1611 = vld [vmem:[#allocation7 + $0x108] sm:$0xf]
    %v1612 = vld [vmem:[#allocation7 + $0x10c] sm:$0xf]
    %v1613 = vld [vmem:[#allocation7 + $0x110] sm:$0xf]
    %v1614 = vld [vmem:[#allocation7 + $0x114] sm:$0xf]
    %v1615 = vld [vmem:[#allocation7 + $0x118] sm:$0xf]
    %v1616 = vld [vmem:[#allocation7 + $0x11c] sm:$0xf]
    %v1617 = vld [vmem:[#allocation7 + $0x120] sm:$0xf]
    %v1618 = vld [vmem:[#allocation7 + $0x124] sm:$0xf]
    %v1619 = vld [vmem:[#allocation7 + $0x128] sm:$0xf]
    %v1620 = vld [vmem:[#allocation7 + $0x12c] sm:$0xf]
    %v1621 = vld [vmem:[#allocation7 + $0x130] sm:$0xf]
    %v1622 = vld [vmem:[#allocation7 + $0x134] sm:$0xf]
    %v1623 = vld [vmem:[#allocation7 + $0x138] sm:$0xf]
    %v1624 = vld [vmem:[#allocation7 + $0x13c] sm:$0xf]
    %v1625 = vld [vmem:[#allocation7 + $0x140] sm:$0xf]
    %v1626 = vld [vmem:[#allocation7 + $0x144] sm:$0xf]
    %v1627 = vld [vmem:[#allocation7 + $0x148] sm:$0xf]
    %v1628 = vld [vmem:[#allocation7 + $0x14c] sm:$0xf]
    %v1629 = vld [vmem:[#allocation7 + $0x150] sm:$0xf]
    %v1630 = vld [vmem:[#allocation7 + $0x154] sm:$0xf]
    %v1631 = vld [vmem:[#allocation7 + $0x158] sm:$0xf]
    %v1632 = vld [vmem:[#allocation7 + $0x15c] sm:$0xf]
    %v1633 = vld [vmem:[#allocation7 + $0x160] sm:$0xf]
    %v1634 = vld [vmem:[#allocation7 + $0x164] sm:$0xf]
    %v1635 = vld [vmem:[#allocation7 + $0x168] sm:$0xf]
    %v1636 = vld [vmem:[#allocation7 + $0x16c] sm:$0xf]
    %v1637 = vld [vmem:[#allocation7 + $0x170] sm:$0xf]
    %v1638 = vld [vmem:[#allocation7 + $0x174] sm:$0xf]
    %v1639 = vld [vmem:[#allocation7 + $0x178] sm:$0xf]
    %v1640 = vld [vmem:[#allocation7 + $0x17c] sm:$0xf]
    %v1641 = vld [vmem:[#allocation7 + $0x180] sm:$0xf]
    %v1642 = vld [vmem:[#allocation7 + $0x184] sm:$0xf]
    %v1643 = vld [vmem:[#allocation7 + $0x188] sm:$0xf]
    %v1644 = vld [vmem:[#allocation7 + $0x18c] sm:$0xf]
    %v1645 = vld [vmem:[#allocation7 + $0x190] sm:$0xf]
    %v1646 = vld [vmem:[#allocation7 + $0x194] sm:$0xf]
    %v1647 = vld [vmem:[#allocation7 + $0x198] sm:$0xf]
    %v1648 = vld [vmem:[#allocation7 + $0x19c] sm:$0xf]
    %v1649 = vld [vmem:[#allocation7 + $0x1a0] sm:$0xf]
    %v1650 = vld [vmem:[#allocation7 + $0x1a4] sm:$0xf]
    %v1651 = vld [vmem:[#allocation7 + $0x1a8] sm:$0xf]
    %v1652 = vld [vmem:[#allocation7 + $0x1ac] sm:$0xf]
    %v1653 = vld [vmem:[#allocation7 + $0x1b0] sm:$0xf]
    %v1654 = vld [vmem:[#allocation7 + $0x1b4] sm:$0xf]
    %v1655 = vld [vmem:[#allocation7 + $0x1b8] sm:$0xf]
    %v1656 = vld [vmem:[#allocation7 + $0x1bc] sm:$0xf]
    %v1657 = vld [vmem:[#allocation7 + $0x1c0] sm:$0xf]
    %v1658 = vld [vmem:[#allocation7 + $0x1c4] sm:$0xf]
    %v1659 = vld [vmem:[#allocation7 + $0x1c8] sm:$0xf]
    %v1660 = vld [vmem:[#allocation7 + $0x1cc] sm:$0xf]
    %v1661 = vld [vmem:[#allocation7 + $0x1d0] sm:$0xf]
    %v1662 = vld [vmem:[#allocation7 + $0x1d4] sm:$0xf]
    %v1663 = vld [vmem:[#allocation7 + $0x1d8] sm:$0xf]
    %v1664 = vld [vmem:[#allocation7 + $0x1dc] sm:$0xf]
    %v1665 = vld [vmem:[#allocation7 + $0x1e0] sm:$0xf]
    %v1666 = vld [vmem:[#allocation7 + $0x1e4] sm:$0xf]
    %v1667 = vld [vmem:[#allocation7 + $0x1e8] sm:$0xf]
    %v1668 = vld [vmem:[#allocation7 + $0x1ec] sm:$0xf]
    %v1669 = vld [vmem:[#allocation7 + $0x1f0] sm:$0xf]
    %v1670 = vld [vmem:[#allocation7 + $0x1f4] sm:$0xf]
    %v1671 = vld [vmem:[#allocation7 + $0x1f8] sm:$0xf]
    %v1672 = vld [vmem:[#allocation7 + $0x1fc] sm:$0xf]
    %v1673 = vld [vmem:[#allocation7 + $0x200] sm:$0xf]
    %v1674 = vld [vmem:[#allocation7 + $0x204] sm:$0xf]
    %v1675 = vld [vmem:[#allocation7 + $0x208] sm:$0xf]
    %v1676 = vld [vmem:[#allocation7 + $0x20c] sm:$0xf]
    %v1677 = vld [vmem:[#allocation7 + $0x210] sm:$0xf]
    %v1678 = vld [vmem:[#allocation7 + $0x214] sm:$0xf]
    %v1679 = vld [vmem:[#allocation7 + $0x218] sm:$0xf]
    %v1680 = vld [vmem:[#allocation7 + $0x21c] sm:$0xf]
    %v1681 = vld [vmem:[#allocation7 + $0x220] sm:$0xf]
    %v1682 = vld [vmem:[#allocation7 + $0x224] sm:$0xf]
    %v1683 = vld [vmem:[#allocation7 + $0x228] sm:$0xf]
    %v1684 = vld [vmem:[#allocation7 + $0x22c] sm:$0xf]
    %v1685 = vld [vmem:[#allocation7 + $0x230] sm:$0xf]
    %v1686 = vld [vmem:[#allocation7 + $0x234] sm:$0xf]
    %v1687 = vld [vmem:[#allocation7 + $0x238] sm:$0xf]
    %v1688 = vld [vmem:[#allocation7 + $0x23c] sm:$0xf]
    %v1689 = vld [vmem:[#allocation7 + $0x240] sm:$0xf]
    %v1690 = vld [vmem:[#allocation7 + $0x244] sm:$0xf]
    %v1691 = vld [vmem:[#allocation7 + $0x248] sm:$0xf]
    %v1692 = vld [vmem:[#allocation7 + $0x24c] sm:$0xf]
    %v1693 = vld [vmem:[#allocation7 + $0x250] sm:$0xf]
    %v1694 = vld [vmem:[#allocation7 + $0x254] sm:$0xf]
    %v1695 = vld [vmem:[#allocation7 + $0x258] sm:$0xf]
    %v1696 = vld [vmem:[#allocation7 + $0x25c] sm:$0xf]
    %v1697 = vld [vmem:[#allocation7 + $0x260] sm:$0xf]
    %v1698 = vld [vmem:[#allocation7 + $0x264] sm:$0xf]
    %v1699 = vld [vmem:[#allocation7 + $0x268] sm:$0xf]
    %v1700 = vld [vmem:[#allocation7 + $0x26c] sm:$0xf]
    %v1701 = vld [vmem:[#allocation7 + $0x270] sm:$0xf]
    %v1702 = vld [vmem:[#allocation7 + $0x274] sm:$0xf]
    %v1703 = vld [vmem:[#allocation7 + $0x278] sm:$0xf]
    %v1704 = vld [vmem:[#allocation7 + $0x27c] sm:$0xf]
    %v1705 = vld [vmem:[#allocation7 + $0x280] sm:$0xf]
    %v1706 = vld [vmem:[#allocation7 + $0x284] sm:$0xf]
    %v1707 = vld [vmem:[#allocation7 + $0x288] sm:$0xf]
    %v1708 = vld [vmem:[#allocation7 + $0x28c] sm:$0xf]
    %v1709 = vld [vmem:[#allocation7 + $0x290] sm:$0xf]
    %v1710 = vld [vmem:[#allocation7 + $0x294] sm:$0xf]
    %v1711 = vld [vmem:[#allocation7 + $0x298] sm:$0xf]
    %v1712 = vld [vmem:[#allocation7 + $0x29c] sm:$0xf]
    %v1713 = vld [vmem:[#allocation7 + $0x2a0] sm:$0xf]
    %v1714 = vld [vmem:[#allocation7 + $0x2a4] sm:$0xf]
    %v1715 = vld [vmem:[#allocation7 + $0x2a8] sm:$0xf]
    %v1716 = vld [vmem:[#allocation7 + $0x2ac] sm:$0xf]
    %v1717 = vld [vmem:[#allocation7 + $0x2b0] sm:$0xf]
    %v1718 = vld [vmem:[#allocation7 + $0x2b4] sm:$0xf]
    %v1719 = vld [vmem:[#allocation7 + $0x2b8] sm:$0xf]
    %v1720 = vld [vmem:[#allocation7 + $0x2bc] sm:$0xf]
    %v1721 = vld [vmem:[#allocation7 + $0x2c0] sm:$0xf]
    %v1722 = vld [vmem:[#allocation7 + $0x2c4] sm:$0xf]
    %v1723 = vld [vmem:[#allocation7 + $0x2c8] sm:$0xf]
    %v1724 = vld [vmem:[#allocation7 + $0x2cc] sm:$0xf]
    %v1725 = vld [vmem:[#allocation7 + $0x2d0] sm:$0xf]
    %v1726 = vld [vmem:[#allocation7 + $0x2d4] sm:$0xf]
    %v1727 = vld [vmem:[#allocation7 + $0x2d8] sm:$0xf]
    %v1728 = vld [vmem:[#allocation7 + $0x2dc] sm:$0xf]
    %v1729 = vld [vmem:[#allocation7 + $0x2e0] sm:$0xf]
    %v1730 = vld [vmem:[#allocation7 + $0x2e4] sm:$0xf]
    %v1731 = vld [vmem:[#allocation7 + $0x2e8] sm:$0xf]
    %v1732 = vld [vmem:[#allocation7 + $0x2ec] sm:$0xf]
    %v1733 = vld [vmem:[#allocation7 + $0x2f0] sm:$0xf]
    %v1734 = vld [vmem:[#allocation7 + $0x2f4] sm:$0xf]
    %v1735 = vld [vmem:[#allocation7 + $0x2f8] sm:$0xf]
    %v1736 = vld [vmem:[#allocation7 + $0x2fc] sm:$0xf]
    %v1737 = vld [vmem:[#allocation7 + $0x300] sm:$0xf]
    %v1738 = vld [vmem:[#allocation7 + $0x304] sm:$0xf]
    %v1739 = vld [vmem:[#allocation7 + $0x308] sm:$0xf]
    %v1740 = vld [vmem:[#allocation7 + $0x30c] sm:$0xf]
    %v1741 = vld [vmem:[#allocation7 + $0x310] sm:$0xf]
    %v1742 = vld [vmem:[#allocation7 + $0x314] sm:$0xf]
    %v1743 = vld [vmem:[#allocation7 + $0x318] sm:$0xf]
    %v1744 = vld [vmem:[#allocation7 + $0x31c] sm:$0xf]
    %v1745 = vld [vmem:[#allocation7 + $0x320] sm:$0xf]
    %v1746 = vld [vmem:[#allocation7 + $0x324] sm:$0xf]
    %v1747 = vld [vmem:[#allocation7 + $0x328] sm:$0xf]
    %v1748 = vld [vmem:[#allocation7 + $0x32c] sm:$0xf]
    %v1749 = vld [vmem:[#allocation7 + $0x330] sm:$0xf]
    %v1750 = vld [vmem:[#allocation7 + $0x334] sm:$0xf]
    %v1751 = vld [vmem:[#allocation7 + $0x338] sm:$0xf]
    %v1752 = vld [vmem:[#allocation7 + $0x33c] sm:$0xf]
    %v1753 = vld [vmem:[#allocation7 + $0x340] sm:$0xf]
    %v1754 = vld [vmem:[#allocation7 + $0x344] sm:$0xf]
    %v1755 = vld [vmem:[#allocation7 + $0x348] sm:$0xf]
    %v1756 = vld [vmem:[#allocation7 + $0x34c] sm:$0xf]
    %v1757 = vld [vmem:[#allocation7 + $0x350] sm:$0xf]
    %v1758 = vld [vmem:[#allocation7 + $0x354] sm:$0xf]
    %v1759 = vld [vmem:[#allocation7 + $0x358] sm:$0xf]
    %v1760 = vld [vmem:[#allocation7 + $0x35c] sm:$0xf]
    %v1761 = vld [vmem:[#allocation7 + $0x360] sm:$0xf]
    %v1762 = vld [vmem:[#allocation7 + $0x364] sm:$0xf]
    %v1763 = vld [vmem:[#allocation7 + $0x368] sm:$0xf]
    %v1764 = vld [vmem:[#allocation7 + $0x36c] sm:$0xf]
    %v1765 = vld [vmem:[#allocation7 + $0x370] sm:$0xf]
    %v1766 = vld [vmem:[#allocation7 + $0x374] sm:$0xf]
    %v1767 = vld [vmem:[#allocation7 + $0x378] sm:$0xf]
    %v1768 = vld [vmem:[#allocation7 + $0x37c] sm:$0xf]
    %v1769 = vld [vmem:[#allocation7 + $0x380] sm:$0xf]
    %v1770 = vld [vmem:[#allocation7 + $0x384] sm:$0xf]
    %v1771 = vld [vmem:[#allocation7 + $0x388] sm:$0xf]
    %v1772 = vld [vmem:[#allocation7 + $0x38c] sm:$0xf]
    %v1773 = vld [vmem:[#allocation7 + $0x390] sm:$0xf]
    %v1774 = vld [vmem:[#allocation7 + $0x394] sm:$0xf]
    %v1775 = vld [vmem:[#allocation7 + $0x398] sm:$0xf]
    %v1776 = vld [vmem:[#allocation7 + $0x39c] sm:$0xf]
    %v1777 = vld [vmem:[#allocation7 + $0x3a0] sm:$0xf]
    %v1778 = vld [vmem:[#allocation7 + $0x3a4] sm:$0xf]
    %v1779 = vld [vmem:[#allocation7 + $0x3a8] sm:$0xf]
    %v1780 = vld [vmem:[#allocation7 + $0x3ac] sm:$0xf]
    %v1781 = vld [vmem:[#allocation7 + $0x3b0] sm:$0xf]
    %v1782 = vld [vmem:[#allocation7 + $0x3b4] sm:$0xf]
    %v1783 = vld [vmem:[#allocation7 + $0x3b8] sm:$0xf]
    %v1784 = vld [vmem:[#allocation7 + $0x3bc] sm:$0xf]
    %v1785 = vld [vmem:[#allocation7 + $0x3c0] sm:$0xf]
    %v1786 = vld [vmem:[#allocation7 + $0x3c4] sm:$0xf]
    %v1787 = vld [vmem:[#allocation7 + $0x3c8] sm:$0xf]
    %v1788 = vld [vmem:[#allocation7 + $0x3cc] sm:$0xf]
    %v1789 = vld [vmem:[#allocation7 + $0x3d0] sm:$0xf]
    %v1790 = vld [vmem:[#allocation7 + $0x3d4] sm:$0xf]
    %v1791 = vld [vmem:[#allocation7 + $0x3d8] sm:$0xf]
    %v1792 = vld [vmem:[#allocation7 + $0x3dc] sm:$0xf]
    %v1793 = vld [vmem:[#allocation7 + $0x3e0] sm:$0xf]
    %v1794 = vld [vmem:[#allocation7 + $0x3e4] sm:$0xf]
    %v1795 = vld [vmem:[#allocation7 + $0x3e8] sm:$0xf]
    %v1796 = vld [vmem:[#allocation7 + $0x3ec] sm:$0xf]
    %v1797 = vld [vmem:[#allocation7 + $0x3f0] sm:$0xf]
    %v1798 = vld [vmem:[#allocation7 + $0x3f4] sm:$0xf]
    %v1799 = vld [vmem:[#allocation7 + $0x3f8] sm:$0xf]
    %v1800 = vld [vmem:[#allocation7 + $0x3fc] sm:$0xf]
    %v1801 = vld [vmem:[%s6] sm:$0x1]
    %v1803 = vlaneseq
    %v1804 = vshrl.u32 %v1803, 7
    %v1805 = vsub.s32 0, %v1804
    %v1806 = vrot.slane %v1801, %v1805
    %v2064 = vunpack.c.l.b16 %v1545
    %v2065 = vunpack.c.l.b16 %v1546
    %v2066 = vunpack.c.l.b16 %v1547
    %v2067 = vunpack.c.l.b16 %v1548
    %v2068 = vunpack.c.l.b16 %v1549
    %v2069 = vunpack.c.l.b16 %v1550
    %v2070 = vunpack.c.l.b16 %v1551
    %v2071 = vunpack.c.l.b16 %v1552
    %v2072 = vunpack.c.l.b16 %v1553
    %v2073 = vunpack.c.l.b16 %v1554
    %v2074 = vunpack.c.l.b16 %v1555
    %v2075 = vunpack.c.l.b16 %v1556
    %v2076 = vunpack.c.l.b16 %v1557
    %v2077 = vunpack.c.l.b16 %v1558
    %v2078 = vunpack.c.l.b16 %v1559
    %v2079 = vunpack.c.l.b16 %v1560
    %v2080 = vunpack.c.l.b16 %v1561
    %v2081 = vunpack.c.l.b16 %v1562
    %v2082 = vunpack.c.l.b16 %v1563
    %v2083 = vunpack.c.l.b16 %v1564
    %v2084 = vunpack.c.l.b16 %v1565
    %v2085 = vunpack.c.l.b16 %v1566
    %v2086 = vunpack.c.l.b16 %v1567
    %v2087 = vunpack.c.l.b16 %v1568
    %v2088 = vunpack.c.l.b16 %v1569
    %v2089 = vunpack.c.l.b16 %v1570
    %v2090 = vunpack.c.l.b16 %v1571
    %v2091 = vunpack.c.l.b16 %v1572
    %v2092 = vunpack.c.l.b16 %v1573
    %v2093 = vunpack.c.l.b16 %v1574
    %v2094 = vunpack.c.l.b16 %v1575
    %v2095 = vunpack.c.l.b16 %v1576
    %v2096 = vunpack.c.l.b16 %v1577
    %v2097 = vunpack.c.l.b16 %v1578
    %v2098 = vunpack.c.l.b16 %v1579
    %v2099 = vunpack.c.l.b16 %v1580
    %v2100 = vunpack.c.l.b16 %v1581
    %v2101 = vunpack.c.l.b16 %v1582
    %v2102 = vunpack.c.l.b16 %v1583
    %v2103 = vunpack.c.l.b16 %v1584
    %v2104 = vunpack.c.l.b16 %v1585
    %v2105 = vunpack.c.l.b16 %v1586
    %v2106 = vunpack.c.l.b16 %v1587
    %v2107 = vunpack.c.l.b16 %v1588
    %v2108 = vunpack.c.l.b16 %v1589
    %v2109 = vunpack.c.l.b16 %v1590
    %v2110 = vunpack.c.l.b16 %v1591
    %v2111 = vunpack.c.l.b16 %v1592
    %v2112 = vunpack.c.l.b16 %v1593
    %v2113 = vunpack.c.l.b16 %v1594
    %v2114 = vunpack.c.l.b16 %v1595
    %v2115 = vunpack.c.l.b16 %v1596
    %v2116 = vunpack.c.l.b16 %v1597
    %v2117 = vunpack.c.l.b16 %v1598
    %v2118 = vunpack.c.l.b16 %v1599
    %v2119 = vunpack.c.l.b16 %v1600
    %v2120 = vunpack.c.l.b16 %v1601
    %v2121 = vunpack.c.l.b16 %v1602
    %v2122 = vunpack.c.l.b16 %v1603
    %v2123 = vunpack.c.l.b16 %v1604
    %v2124 = vunpack.c.l.b16 %v1605
    %v2125 = vunpack.c.l.b16 %v1606
    %v2126 = vunpack.c.l.b16 %v1607
    %v2127 = vunpack.c.l.b16 %v1608
    %v2128 = vunpack.c.l.b16 %v1609
    %v2129 = vunpack.c.l.b16 %v1610
    %v2130 = vunpack.c.l.b16 %v1611
    %v2131 = vunpack.c.l.b16 %v1612
    %v2132 = vunpack.c.l.b16 %v1613
    %v2133 = vunpack.c.l.b16 %v1614
    %v2134 = vunpack.c.l.b16 %v1615
    %v2135 = vunpack.c.l.b16 %v1616
    %v2136 = vunpack.c.l.b16 %v1617
    %v2137 = vunpack.c.l.b16 %v1618
    %v2138 = vunpack.c.l.b16 %v1619
    %v2139 = vunpack.c.l.b16 %v1620
    %v2140 = vunpack.c.l.b16 %v1621
    %v2141 = vunpack.c.l.b16 %v1622
    %v2142 = vunpack.c.l.b16 %v1623
    %v2143 = vunpack.c.l.b16 %v1624
    %v2144 = vunpack.c.l.b16 %v1625
    %v2145 = vunpack.c.l.b16 %v1626
    %v2146 = vunpack.c.l.b16 %v1627
    %v2147 = vunpack.c.l.b16 %v1628
    %v2148 = vunpack.c.l.b16 %v1629
    %v2149 = vunpack.c.l.b16 %v1630
    %v2150 = vunpack.c.l.b16 %v1631
    %v2151 = vunpack.c.l.b16 %v1632
    %v2152 = vunpack.c.l.b16 %v1633
    %v2153 = vunpack.c.l.b16 %v1634
    %v2154 = vunpack.c.l.b16 %v1635
    %v2155 = vunpack.c.l.b16 %v1636
    %v2156 = vunpack.c.l.b16 %v1637
    %v2157 = vunpack.c.l.b16 %v1638
    %v2158 = vunpack.c.l.b16 %v1639
    %v2159 = vunpack.c.l.b16 %v1640
    %v2160 = vunpack.c.l.b16 %v1641
    %v2161 = vunpack.c.l.b16 %v1642
    %v2162 = vunpack.c.l.b16 %v1643
    %v2163 = vunpack.c.l.b16 %v1644
    %v2164 = vunpack.c.l.b16 %v1645
    %v2165 = vunpack.c.l.b16 %v1646
    %v2166 = vunpack.c.l.b16 %v1647
    %v2167 = vunpack.c.l.b16 %v1648
    %v2168 = vunpack.c.l.b16 %v1649
    %v2169 = vunpack.c.l.b16 %v1650
    %v2170 = vunpack.c.l.b16 %v1651
    %v2171 = vunpack.c.l.b16 %v1652
    %v2172 = vunpack.c.l.b16 %v1653
    %v2173 = vunpack.c.l.b16 %v1654
    %v2174 = vunpack.c.l.b16 %v1655
    %v2175 = vunpack.c.l.b16 %v1656
    %v2176 = vunpack.c.l.b16 %v1657
    %v2177 = vunpack.c.l.b16 %v1658
    %v2178 = vunpack.c.l.b16 %v1659
    %v2179 = vunpack.c.l.b16 %v1660
    %v2180 = vunpack.c.l.b16 %v1661
    %v2181 = vunpack.c.l.b16 %v1662
    %v2182 = vunpack.c.l.b16 %v1663
    %v2183 = vunpack.c.l.b16 %v1664
    %v2184 = vunpack.c.l.b16 %v1665
    %v2185 = vunpack.c.l.b16 %v1666
    %v2186 = vunpack.c.l.b16 %v1667
    %v2187 = vunpack.c.l.b16 %v1668
    %v2188 = vunpack.c.l.b16 %v1669
    %v2189 = vunpack.c.l.b16 %v1670
    %v2190 = vunpack.c.l.b16 %v1671
    %v2191 = vunpack.c.l.b16 %v1672
    %v2192 = vunpack.c.l.b16 %v1673
    %v2193 = vunpack.c.l.b16 %v1674
    %v2194 = vunpack.c.l.b16 %v1675
    %v2195 = vunpack.c.l.b16 %v1676
    %v2196 = vunpack.c.l.b16 %v1677
    %v2197 = vunpack.c.l.b16 %v1678
    %v2198 = vunpack.c.l.b16 %v1679
    %v2199 = vunpack.c.l.b16 %v1680
    %v2200 = vunpack.c.l.b16 %v1681
    %v2201 = vunpack.c.l.b16 %v1682
    %v2202 = vunpack.c.l.b16 %v1683
    %v2203 = vunpack.c.l.b16 %v1684
    %v2204 = vunpack.c.l.b16 %v1685
    %v2205 = vunpack.c.l.b16 %v1686
    %v2206 = vunpack.c.l.b16 %v1687
    %v2207 = vunpack.c.l.b16 %v1688
    %v2208 = vunpack.c.l.b16 %v1689
    %v2209 = vunpack.c.l.b16 %v1690
    %v2210 = vunpack.c.l.b16 %v1691
    %v2211 = vunpack.c.l.b16 %v1692
    %v2212 = vunpack.c.l.b16 %v1693
    %v2213 = vunpack.c.l.b16 %v1694
    %v2214 = vunpack.c.l.b16 %v1695
    %v2215 = vunpack.c.l.b16 %v1696
    %v2216 = vunpack.c.l.b16 %v1697
    %v2217 = vunpack.c.l.b16 %v1698
    %v2218 = vunpack.c.l.b16 %v1699
    %v2219 = vunpack.c.l.b16 %v1700
    %v2220 = vunpack.c.l.b16 %v1701
    %v2221 = vunpack.c.l.b16 %v1702
    %v2222 = vunpack.c.l.b16 %v1703
    %v2223 = vunpack.c.l.b16 %v1704
    %v2224 = vunpack.c.l.b16 %v1705
    %v2225 = vunpack.c.l.b16 %v1706
    %v2226 = vunpack.c.l.b16 %v1707
    %v2227 = vunpack.c.l.b16 %v1708
    %v2228 = vunpack.c.l.b16 %v1709
    %v2229 = vunpack.c.l.b16 %v1710
    %v2230 = vunpack.c.l.b16 %v1711
    %v2231 = vunpack.c.l.b16 %v1712
    %v2232 = vunpack.c.l.b16 %v1713
    %v2233 = vunpack.c.l.b16 %v1714
    %v2234 = vunpack.c.l.b16 %v1715
    %v2235 = vunpack.c.l.b16 %v1716
    %v2236 = vunpack.c.l.b16 %v1717
    %v2237 = vunpack.c.l.b16 %v1718
    %v2238 = vunpack.c.l.b16 %v1719
    %v2239 = vunpack.c.l.b16 %v1720
    %v2240 = vunpack.c.l.b16 %v1721
    %v2241 = vunpack.c.l.b16 %v1722
    %v2242 = vunpack.c.l.b16 %v1723
    %v2243 = vunpack.c.l.b16 %v1724
    %v2244 = vunpack.c.l.b16 %v1725
    %v2245 = vunpack.c.l.b16 %v1726
    %v2246 = vunpack.c.l.b16 %v1727
    %v2247 = vunpack.c.l.b16 %v1728
    %v2248 = vunpack.c.l.b16 %v1729
    %v2249 = vunpack.c.l.b16 %v1730
    %v2250 = vunpack.c.l.b16 %v1731
    %v2251 = vunpack.c.l.b16 %v1732
    %v2252 = vunpack.c.l.b16 %v1733
    %v2253 = vunpack.c.l.b16 %v1734
    %v2254 = vunpack.c.l.b16 %v1735
    %v2255 = vunpack.c.l.b16 %v1736
    %v2256 = vunpack.c.l.b16 %v1737
    %v2257 = vunpack.c.l.b16 %v1738
    %v2258 = vunpack.c.l.b16 %v1739
    %v2259 = vunpack.c.l.b16 %v1740
    %v2260 = vunpack.c.l.b16 %v1741
    %v2261 = vunpack.c.l.b16 %v1742
    %v2262 = vunpack.c.l.b16 %v1743
    %v2263 = vunpack.c.l.b16 %v1744
    %v2264 = vunpack.c.l.b16 %v1745
    %v2265 = vunpack.c.l.b16 %v1746
    %v2266 = vunpack.c.l.b16 %v1747
    %v2267 = vunpack.c.l.b16 %v1748
    %v2268 = vunpack.c.l.b16 %v1749
    %v2269 = vunpack.c.l.b16 %v1750
    %v2270 = vunpack.c.l.b16 %v1751
    %v2271 = vunpack.c.l.b16 %v1752
    %v2272 = vunpack.c.l.b16 %v1753
    %v2273 = vunpack.c.l.b16 %v1754
    %v2274 = vunpack.c.l.b16 %v1755
    %v2275 = vunpack.c.l.b16 %v1756
    %v2276 = vunpack.c.l.b16 %v1757
    %v2277 = vunpack.c.l.b16 %v1758
    %v2278 = vunpack.c.l.b16 %v1759
    %v2279 = vunpack.c.l.b16 %v1760
    %v2280 = vunpack.c.l.b16 %v1761
    %v2281 = vunpack.c.l.b16 %v1762
    %v2282 = vunpack.c.l.b16 %v1763
    %v2283 = vunpack.c.l.b16 %v1764
    %v2284 = vunpack.c.l.b16 %v1765
    %v2285 = vunpack.c.l.b16 %v1766
    %v2286 = vunpack.c.l.b16 %v1767
    %v2287 = vunpack.c.l.b16 %v1768
    %v2288 = vunpack.c.l.b16 %v1769
    %v2289 = vunpack.c.l.b16 %v1770
    %v2290 = vunpack.c.l.b16 %v1771
    %v2291 = vunpack.c.l.b16 %v1772
    %v2292 = vunpack.c.l.b16 %v1773
    %v2293 = vunpack.c.l.b16 %v1774
    %v2294 = vunpack.c.l.b16 %v1775
    %v2295 = vunpack.c.l.b16 %v1776
    %v2296 = vunpack.c.l.b16 %v1777
    %v2297 = vunpack.c.l.b16 %v1778
    %v2298 = vunpack.c.l.b16 %v1779
    %v2299 = vunpack.c.l.b16 %v1780
    %v2300 = vunpack.c.l.b16 %v1781
    %v2301 = vunpack.c.l.b16 %v1782
    %v2302 = vunpack.c.l.b16 %v1783
    %v2303 = vunpack.c.l.b16 %v1784
    %v2304 = vunpack.c.l.b16 %v1785
    %v2305 = vunpack.c.l.b16 %v1786
    %v2306 = vunpack.c.l.b16 %v1787
    %v2307 = vunpack.c.l.b16 %v1788
    %v2308 = vunpack.c.l.b16 %v1789
    %v2309 = vunpack.c.l.b16 %v1790
    %v2310 = vunpack.c.l.b16 %v1791
    %v2311 = vunpack.c.l.b16 %v1792
    %v2312 = vunpack.c.l.b16 %v1793
    %v2313 = vunpack.c.l.b16 %v1794
    %v2314 = vunpack.c.l.b16 %v1795
    %v2315 = vunpack.c.l.b16 %v1796
    %v2316 = vunpack.c.l.b16 %v1797
    %v2317 = vunpack.c.l.b16 %v1798
    %v2318 = vunpack.c.l.b16 %v1799
    %v2319 = vunpack.c.l.b16 %v1800
    %v2320 = vpack.c.b16 %v2065, %v2064
    %v2321 = vpack.c.b16 %v2067, %v2066
    %v2322 = vpack.c.b16 %v2069, %v2068
    %v2323 = vpack.c.b16 %v2071, %v2070
    %v2324 = vpack.c.b16 %v2073, %v2072
    %v2325 = vpack.c.b16 %v2075, %v2074
    %v2326 = vpack.c.b16 %v2077, %v2076
    %v2327 = vpack.c.b16 %v2079, %v2078
    %v2328 = vpack.c.b16 %v2081, %v2080
    %v2329 = vpack.c.b16 %v2083, %v2082
    %v2330 = vpack.c.b16 %v2085, %v2084
    %v2331 = vpack.c.b16 %v2087, %v2086
    %v2332 = vpack.c.b16 %v2089, %v2088
    %v2333 = vpack.c.b16 %v2091, %v2090
    %v2334 = vpack.c.b16 %v2093, %v2092
    %v2335 = vpack.c.b16 %v2095, %v2094
    %v2336 = vpack.c.b16 %v2097, %v2096
    %v2337 = vpack.c.b16 %v2099, %v2098
    %v2338 = vpack.c.b16 %v2101, %v2100
    %v2339 = vpack.c.b16 %v2103, %v2102
    %v2340 = vpack.c.b16 %v2105, %v2104
    %v2341 = vpack.c.b16 %v2107, %v2106
    %v2342 = vpack.c.b16 %v2109, %v2108
    %v2343 = vpack.c.b16 %v2111, %v2110
    %v2344 = vpack.c.b16 %v2113, %v2112
    %v2345 = vpack.c.b16 %v2115, %v2114
    %v2346 = vpack.c.b16 %v2117, %v2116
    %v2347 = vpack.c.b16 %v2119, %v2118
    %v2348 = vpack.c.b16 %v2121, %v2120
    %v2349 = vpack.c.b16 %v2123, %v2122
    %v2350 = vpack.c.b16 %v2125, %v2124
    %v2351 = vpack.c.b16 %v2127, %v2126
    %v2352 = vpack.c.b16 %v2129, %v2128
    %v2353 = vpack.c.b16 %v2131, %v2130
    %v2354 = vpack.c.b16 %v2133, %v2132
    %v2355 = vpack.c.b16 %v2135, %v2134
    %v2356 = vpack.c.b16 %v2137, %v2136
    %v2357 = vpack.c.b16 %v2139, %v2138
    %v2358 = vpack.c.b16 %v2141, %v2140
    %v2359 = vpack.c.b16 %v2143, %v2142
    %v2360 = vpack.c.b16 %v2145, %v2144
    %v2361 = vpack.c.b16 %v2147, %v2146
    %v2362 = vpack.c.b16 %v2149, %v2148
    %v2363 = vpack.c.b16 %v2151, %v2150
    %v2364 = vpack.c.b16 %v2153, %v2152
    %v2365 = vpack.c.b16 %v2155, %v2154
    %v2366 = vpack.c.b16 %v2157, %v2156
    %v2367 = vpack.c.b16 %v2159, %v2158
    %v2368 = vpack.c.b16 %v2161, %v2160
    %v2369 = vpack.c.b16 %v2163, %v2162
    %v2370 = vpack.c.b16 %v2165, %v2164
    %v2371 = vpack.c.b16 %v2167, %v2166
    %v2372 = vpack.c.b16 %v2169, %v2168
    %v2373 = vpack.c.b16 %v2171, %v2170
    %v2374 = vpack.c.b16 %v2173, %v2172
    %v2375 = vpack.c.b16 %v2175, %v2174
    %v2376 = vpack.c.b16 %v2177, %v2176
    %v2377 = vpack.c.b16 %v2179, %v2178
    %v2378 = vpack.c.b16 %v2181, %v2180
    %v2379 = vpack.c.b16 %v2183, %v2182
    %v2380 = vpack.c.b16 %v2185, %v2184
    %v2381 = vpack.c.b16 %v2187, %v2186
    %v2382 = vpack.c.b16 %v2189, %v2188
    %v2383 = vpack.c.b16 %v2191, %v2190
    %v2384 = vpack.c.b16 %v2193, %v2192
    %v2385 = vpack.c.b16 %v2195, %v2194
    %v2386 = vpack.c.b16 %v2197, %v2196
    %v2387 = vpack.c.b16 %v2199, %v2198
    %v2388 = vpack.c.b16 %v2201, %v2200
    %v2389 = vpack.c.b16 %v2203, %v2202
    %v2390 = vpack.c.b16 %v2205, %v2204
    %v2391 = vpack.c.b16 %v2207, %v2206
    %v2392 = vpack.c.b16 %v2209, %v2208
    %v2393 = vpack.c.b16 %v2211, %v2210
    %v2394 = vpack.c.b16 %v2213, %v2212
    %v2395 = vpack.c.b16 %v2215, %v2214
    %v2396 = vpack.c.b16 %v2217, %v2216
    %v2397 = vpack.c.b16 %v2219, %v2218
    %v2398 = vpack.c.b16 %v2221, %v2220
    %v2399 = vpack.c.b16 %v2223, %v2222
    %v2400 = vpack.c.b16 %v2225, %v2224
    %v2401 = vpack.c.b16 %v2227, %v2226
    %v2402 = vpack.c.b16 %v2229, %v2228
    %v2403 = vpack.c.b16 %v2231, %v2230
    %v2404 = vpack.c.b16 %v2233, %v2232
    %v2405 = vpack.c.b16 %v2235, %v2234
    %v2406 = vpack.c.b16 %v2237, %v2236
    %v2407 = vpack.c.b16 %v2239, %v2238
    %v2408 = vpack.c.b16 %v2241, %v2240
    %v2409 = vpack.c.b16 %v2243, %v2242
    %v2410 = vpack.c.b16 %v2245, %v2244
    %v2411 = vpack.c.b16 %v2247, %v2246
    %v2412 = vpack.c.b16 %v2249, %v2248
    %v2413 = vpack.c.b16 %v2251, %v2250
    %v2414 = vpack.c.b16 %v2253, %v2252
    %v2415 = vpack.c.b16 %v2255, %v2254
    %v2416 = vpack.c.b16 %v2257, %v2256
    %v2417 = vpack.c.b16 %v2259, %v2258
    %v2418 = vpack.c.b16 %v2261, %v2260
    %v2419 = vpack.c.b16 %v2263, %v2262
    %v2420 = vpack.c.b16 %v2265, %v2264
    %v2421 = vpack.c.b16 %v2267, %v2266
    %v2422 = vpack.c.b16 %v2269, %v2268
    %v2423 = vpack.c.b16 %v2271, %v2270
    %v2424 = vpack.c.b16 %v2273, %v2272
    %v2425 = vpack.c.b16 %v2275, %v2274
    %v2426 = vpack.c.b16 %v2277, %v2276
    %v2427 = vpack.c.b16 %v2279, %v2278
    %v2428 = vpack.c.b16 %v2281, %v2280
    %v2429 = vpack.c.b16 %v2283, %v2282
    %v2430 = vpack.c.b16 %v2285, %v2284
    %v2431 = vpack.c.b16 %v2287, %v2286
    %v2432 = vpack.c.b16 %v2289, %v2288
    %v2433 = vpack.c.b16 %v2291, %v2290
    %v2434 = vpack.c.b16 %v2293, %v2292
    %v2435 = vpack.c.b16 %v2295, %v2294
    %v2436 = vpack.c.b16 %v2297, %v2296
    %v2437 = vpack.c.b16 %v2299, %v2298
    %v2438 = vpack.c.b16 %v2301, %v2300
    %v2439 = vpack.c.b16 %v2303, %v2302
    %v2440 = vpack.c.b16 %v2305, %v2304
    %v2441 = vpack.c.b16 %v2307, %v2306
    %v2442 = vpack.c.b16 %v2309, %v2308
    %v2443 = vpack.c.b16 %v2311, %v2310
    %v2444 = vpack.c.b16 %v2313, %v2312
    %v2445 = vpack.c.b16 %v2315, %v2314
    %v2446 = vpack.c.b16 %v2317, %v2316
    %v2447 = vpack.c.b16 %v2319, %v2318
    %2576 = vmatprep.subr.bf16.mxu0 0
    %2577 = vmatpush1.bf16.msra.mxu0 %v2320
    %2578 = vmatprep.subr.bf16.mxu0 0
    %2579 = vmatpush1.bf16.msra.mxu0 %v2321
    %2580 = vmatprep.subr.bf16.mxu0 0
    %2581 = vmatpush1.bf16.msra.mxu0 %v2322
    %2582 = vmatprep.subr.bf16.mxu0 0
    %2583 = vmatpush1.bf16.msra.mxu0 %v2323
    %2584 = vmatprep.subr.bf16.mxu0 0
    %2585 = vmatpush1.bf16.msra.mxu0 %v2324
    %2586 = vmatprep.subr.bf16.mxu0 0
    %2587 = vmatpush1.bf16.msra.mxu0 %v2325
    %2588 = vmatprep.subr.bf16.mxu0 0
    %2589 = vmatpush1.bf16.msra.mxu0 %v2326
    %2590 = vmatprep.subr.bf16.mxu0 0
    %2591 = vmatpush1.bf16.msra.mxu0 %v2327
    %2592 = vmatprep.subr.bf16.mxu0 0
    %2593 = vmatpush1.bf16.msra.mxu0 %v2328
    %2594 = vmatprep.subr.bf16.mxu0 0
    %2595 = vmatpush1.bf16.msra.mxu0 %v2329
    %2596 = vmatprep.subr.bf16.mxu0 0
    %2597 = vmatpush1.bf16.msra.mxu0 %v2330
    %2598 = vmatprep.subr.bf16.mxu0 0
    %2599 = vmatpush1.bf16.msra.mxu0 %v2331
    %2600 = vmatprep.subr.bf16.mxu0 0
    %2601 = vmatpush1.bf16.msra.mxu0 %v2332
    %2602 = vmatprep.subr.bf16.mxu0 0
    %2603 = vmatpush1.bf16.msra.mxu0 %v2333
    %2604 = vmatprep.subr.bf16.mxu0 0
    %2605 = vmatpush1.bf16.msra.mxu0 %v2334
    %2606 = vmatprep.subr.bf16.mxu0 0
    %2607 = vmatpush1.bf16.msra.mxu0 %v2335
    %2608 = vmatprep.mubr.bf16.mxu0 %v1530
    %2609 = vmatmul.mubr.bf16.gmra.mrb[0].mxu0 %v1529
    %v2610 = vpop.f32.mrb[0].mxu0
    %v2611 = vadd.f32 %v1806, %v2610
    %v2612 = vpop.f32.mrb[0].mxu0
    %v2613 = vpop.f32.mrb[0].mxu0
    %v2614 = vpop.f32.mrb[0].mxu0
    %2615 = vdwg.mxu0
    %2616 = vmatprep.subr.bf16.mxu0 0
    %2617 = vmatpush1.bf16.msra.mxu0 %v2336
    %2618 = vmatprep.subr.bf16.mxu0 0
    %2619 = vmatpush1.bf16.msra.mxu0 %v2337
    %2620 = vmatprep.subr.bf16.mxu0 0
    %2621 = vmatpush1.bf16.msra.mxu0 %v2338
    %2622 = vmatprep.subr.bf16.mxu0 0
    %2623 = vmatpush1.bf16.msra.mxu0 %v2339
    %2624 = vmatprep.subr.bf16.mxu0 0
    %2625 = vmatpush1.bf16.msra.mxu0 %v2340
    %2626 = vmatprep.subr.bf16.mxu0 0
    %2627 = vmatpush1.bf16.msra.mxu0 %v2341
    %2628 = vmatprep.subr.bf16.mxu0 0
    %2629 = vmatpush1.bf16.msra.mxu0 %v2342
    %2630 = vmatprep.subr.bf16.mxu0 0
    %2631 = vmatpush1.bf16.msra.mxu0 %v2343
    %2632 = vmatprep.subr.bf16.mxu0 0
    %2633 = vmatpush1.bf16.msra.mxu0 %v2344
    %2634 = vmatprep.subr.bf16.mxu0 0
    %2635 = vmatpush1.bf16.msra.mxu0 %v2345
    %2636 = vmatprep.subr.bf16.mxu0 0
    %2637 = vmatpush1.bf16.msra.mxu0 %v2346
    %2638 = vmatprep.subr.bf16.mxu0 0
    %2639 = vmatpush1.bf16.msra.mxu0 %v2347
    %2640 = vmatprep.subr.bf16.mxu0 0
    %2641 = vmatpush1.bf16.msra.mxu0 %v2348
    %2642 = vmatprep.subr.bf16.mxu0 0
    %2643 = vmatpush1.bf16.msra.mxu0 %v2349
    %2644 = vmatprep.subr.bf16.mxu0 0
    %2645 = vmatpush1.bf16.msra.mxu0 %v2350
    %2646 = vmatprep.subr.bf16.mxu0 0
    %2647 = vmatpush1.bf16.msra.mxu0 %v2351
    %2648 = vmatprep.mubr.bf16.mxu0 %v1532
    %2649 = vmatmul.mubr.bf16.gmra.mrb[0].mxu0 %v1531
    %v2650 = vpop.f32.mrb[0].mxu0
    %v2651 = vadd.f32 %v2611, %v2650
    %v2652 = vpop.f32.mrb[0].mxu0
    %v2653 = vpop.f32.mrb[0].mxu0
    %v2654 = vpop.f32.mrb[0].mxu0
    %2655 = vdwg.mxu0
    %2656 = vmatprep.subr.bf16.mxu0 0
    %2657 = vmatpush1.bf16.msra.mxu0 %v2352
    %2658 = vmatprep.subr.bf16.mxu0 0
    %2659 = vmatpush1.bf16.msra.mxu0 %v2353
    %2660 = vmatprep.subr.bf16.mxu0 0
    %2661 = vmatpush1.bf16.msra.mxu0 %v2354
    %2662 = vmatprep.subr.bf16.mxu0 0
    %2663 = vmatpush1.bf16.msra.mxu0 %v2355
    %2664 = vmatprep.subr.bf16.mxu0 0
    %2665 = vmatpush1.bf16.msra.mxu0 %v2356
    %2666 = vmatprep.subr.bf16.mxu0 0
    %2667 = vmatpush1.bf16.msra.mxu0 %v2357
    %2668 = vmatprep.subr.bf16.mxu0 0
    %2669 = vmatpush1.bf16.msra.mxu0 %v2358
    %2670 = vmatprep.subr.bf16.mxu0 0
    %2671 = vmatpush1.bf16.msra.mxu0 %v2359
    %2672 = vmatprep.subr.bf16.mxu0 0
    %2673 = vmatpush1.bf16.msra.mxu0 %v2360
    %2674 = vmatprep.subr.bf16.mxu0 0
    %2675 = vmatpush1.bf16.msra.mxu0 %v2361
    %2676 = vmatprep.subr.bf16.mxu0 0
    %2677 = vmatpush1.bf16.msra.mxu0 %v2362
    %2678 = vmatprep.subr.bf16.mxu0 0
    %2679 = vmatpush1.bf16.msra.mxu0 %v2363
    %2680 = vmatprep.subr.bf16.mxu0 0
    %2681 = vmatpush1.bf16.msra.mxu0 %v2364
    %2682 = vmatprep.subr.bf16.mxu0 0
    %2683 = vmatpush1.bf16.msra.mxu0 %v2365
    %2684 = vmatprep.subr.bf16.mxu0 0
    %2685 = vmatpush1.bf16.msra.mxu0 %v2366
    %2686 = vmatprep.subr.bf16.mxu0 0
    %2687 = vmatpush1.bf16.msra.mxu0 %v2367
    %2688 = vmatprep.mubr.bf16.mxu0 %v1534
    %2689 = vmatmul.mubr.bf16.gmra.mrb[0].mxu0 %v1533
    %v2690 = vpop.f32.mrb[0].mxu0
    %v2691 = vadd.f32 %v2651, %v2690
    %v2692 = vpop.f32.mrb[0].mxu0
    %v2693 = vpop.f32.mrb[0].mxu0
    %v2694 = vpop.f32.mrb[0].mxu0
    %2695 = vdwg.mxu0
    %2696 = vmatprep.subr.bf16.mxu0 0
    %2697 = vmatpush1.bf16.msra.mxu0 %v2368
    %2698 = vmatprep.subr.bf16.mxu0 0
    %2699 = vmatpush1.bf16.msra.mxu0 %v2369
    %2700 = vmatprep.subr.bf16.mxu0 0
    %2701 = vmatpush1.bf16.msra.mxu0 %v2370
    %2702 = vmatprep.subr.bf16.mxu0 0
    %2703 = vmatpush1.bf16.msra.mxu0 %v2371
    %2704 = vmatprep.subr.bf16.mxu0 0
    %2705 = vmatpush1.bf16.msra.mxu0 %v2372
    %2706 = vmatprep.subr.bf16.mxu0 0
    %2707 = vmatpush1.bf16.msra.mxu0 %v2373
    %2708 = vmatprep.subr.bf16.mxu0 0
    %2709 = vmatpush1.bf16.msra.mxu0 %v2374
    %2710 = vmatprep.subr.bf16.mxu0 0
    %2711 = vmatpush1.bf16.msra.mxu0 %v2375
    %2712 = vmatprep.subr.bf16.mxu0 0
    %2713 = vmatpush1.bf16.msra.mxu0 %v2376
    %2714 = vmatprep.subr.bf16.mxu0 0
    %2715 = vmatpush1.bf16.msra.mxu0 %v2377
    %2716 = vmatprep.subr.bf16.mxu0 0
    %2717 = vmatpush1.bf16.msra.mxu0 %v2378
    %2718 = vmatprep.subr.bf16.mxu0 0
    %2719 = vmatpush1.bf16.msra.mxu0 %v2379
    %2720 = vmatprep.subr.bf16.mxu0 0
    %2721 = vmatpush1.bf16.msra.mxu0 %v2380
    %2722 = vmatprep.subr.bf16.mxu0 0
    %2723 = vmatpush1.bf16.msra.mxu0 %v2381
    %2724 = vmatprep.subr.bf16.mxu0 0
    %2725 = vmatpush1.bf16.msra.mxu0 %v2382
    %2726 = vmatprep.subr.bf16.mxu0 0
    %2727 = vmatpush1.bf16.msra.mxu0 %v2383
    %2728 = vmatprep.mubr.bf16.mxu0 %v1536
    %2729 = vmatmul.mubr.bf16.gmra.mrb[0].mxu0 %v1535
    %v2730 = vpop.f32.mrb[0].mxu0
    %v2731 = vadd.f32 %v2691, %v2730
    %v2732 = vpop.f32.mrb[0].mxu0
    %v2733 = vpop.f32.mrb[0].mxu0
    %v2734 = vpop.f32.mrb[0].mxu0
    %2735 = vdwg.mxu0
    %2736 = vmatprep.subr.bf16.mxu0 0
    %2737 = vmatpush1.bf16.msra.mxu0 %v2384
    %2738 = vmatprep.subr.bf16.mxu0 0
    %2739 = vmatpush1.bf16.msra.mxu0 %v2385
    %2740 = vmatprep.subr.bf16.mxu0 0
    %2741 = vmatpush1.bf16.msra.mxu0 %v2386
    %2742 = vmatprep.subr.bf16.mxu0 0
    %2743 = vmatpush1.bf16.msra.mxu0 %v2387
    %2744 = vmatprep.subr.bf16.mxu0 0
    %2745 = vmatpush1.bf16.msra.mxu0 %v2388
    %2746 = vmatprep.subr.bf16.mxu0 0
    %2747 = vmatpush1.bf16.msra.mxu0 %v2389
    %2748 = vmatprep.subr.bf16.mxu0 0
    %2749 = vmatpush1.bf16.msra.mxu0 %v2390
    %2750 = vmatprep.subr.bf16.mxu0 0
    %2751 = vmatpush1.bf16.msra.mxu0 %v2391
    %2752 = vmatprep.subr.bf16.mxu0 0
    %2753 = vmatpush1.bf16.msra.mxu0 %v2392
    %2754 = vmatprep.subr.bf16.mxu0 0
    %2755 = vmatpush1.bf16.msra.mxu0 %v2393
    %2756 = vmatprep.subr.bf16.mxu0 0
    %2757 = vmatpush1.bf16.msra.mxu0 %v2394
    %2758 = vmatprep.subr.bf16.mxu0 0
    %2759 = vmatpush1.bf16.msra.mxu0 %v2395
    %2760 = vmatprep.subr.bf16.mxu0 0
    %2761 = vmatpush1.bf16.msra.mxu0 %v2396
    %2762 = vmatprep.subr.bf16.mxu0 0
    %2763 = vmatpush1.bf16.msra.mxu0 %v2397
    %2764 = vmatprep.subr.bf16.mxu0 0
    %2765 = vmatpush1.bf16.msra.mxu0 %v2398
    %2766 = vmatprep.subr.bf16.mxu0 0
    %2767 = vmatpush1.bf16.msra.mxu0 %v2399
    %2768 = vmatprep.mubr.bf16.mxu0 %v1538
    %2769 = vmatmul.mubr.bf16.gmra.mrb[0].mxu0 %v1537
    %v2770 = vpop.f32.mrb[0].mxu0
    %v2771 = vadd.f32 %v2731, %v2770
    %v2772 = vpop.f32.mrb[0].mxu0
    %v2773 = vpop.f32.mrb[0].mxu0
    %v2774 = vpop.f32.mrb[0].mxu0
    %2775 = vdwg.mxu0
    %2776 = vmatprep.subr.bf16.mxu0 0
    %2777 = vmatpush1.bf16.msra.mxu0 %v2400
    %2778 = vmatprep.subr.bf16.mxu0 0
    %2779 = vmatpush1.bf16.msra.mxu0 %v2401
    %2780 = vmatprep.subr.bf16.mxu0 0
    %2781 = vmatpush1.bf16.msra.mxu0 %v2402
    %2782 = vmatprep.subr.bf16.mxu0 0
    %2783 = vmatpush1.bf16.msra.mxu0 %v2403
    %2784 = vmatprep.subr.bf16.mxu0 0
    %2785 = vmatpush1.bf16.msra.mxu0 %v2404
    %2786 = vmatprep.subr.bf16.mxu0 0
    %2787 = vmatpush1.bf16.msra.mxu0 %v2405
    %2788 = vmatprep.subr.bf16.mxu0 0
    %2789 = vmatpush1.bf16.msra.mxu0 %v2406
    %2790 = vmatprep.subr.bf16.mxu0 0
    %2791 = vmatpush1.bf16.msra.mxu0 %v2407
    %2792 = vmatprep.subr.bf16.mxu0 0
    %2793 = vmatpush1.bf16.msra.mxu0 %v2408
    %2794 = vmatprep.subr.bf16.mxu0 0
    %2795 = vmatpush1.bf16.msra.mxu0 %v2409
    %2796 = vmatprep.subr.bf16.mxu0 0
    %2797 = vmatpush1.bf16.msra.mxu0 %v2410
    %2798 = vmatprep.subr.bf16.mxu0 0
    %2799 = vmatpush1.bf16.msra.mxu0 %v2411
    %2800 = vmatprep.subr.bf16.mxu0 0
    %2801 = vmatpush1.bf16.msra.mxu0 %v2412
    %2802 = vmatprep.subr.bf16.mxu0 0
    %2803 = vmatpush1.bf16.msra.mxu0 %v2413
    %2804 = vmatprep.subr.bf16.mxu0 0
    %2805 = vmatpush1.bf16.msra.mxu0 %v2414
    %2806 = vmatprep.subr.bf16.mxu0 0
    %2807 = vmatpush1.bf16.msra.mxu0 %v2415
    %2808 = vmatprep.mubr.bf16.mxu0 %v1540
    %2809 = vmatmul.mubr.bf16.gmra.mrb[0].mxu0 %v1539
    %v2810 = vpop.f32.mrb[0].mxu0
    %v2811 = vadd.f32 %v2771, %v2810
    %v2812 = vpop.f32.mrb[0].mxu0
    %v2813 = vpop.f32.mrb[0].mxu0
    %v2814 = vpop.f32.mrb[0].mxu0
    %2815 = vdwg.mxu0
    %2816 = vmatprep.subr.bf16.mxu0 0
    %2817 = vmatpush1.bf16.msra.mxu0 %v2416
    %2818 = vmatprep.subr.bf16.mxu0 0
    %2819 = vmatpush1.bf16.msra.mxu0 %v2417
    %2820 = vmatprep.subr.bf16.mxu0 0
    %2821 = vmatpush1.bf16.msra.mxu0 %v2418
    %2822 = vmatprep.subr.bf16.mxu0 0
    %2823 = vmatpush1.bf16.msra.mxu0 %v2419
    %2824 = vmatprep.subr.bf16.mxu0 0
    %2825 = vmatpush1.bf16.msra.mxu0 %v2420
    %2826 = vmatprep.subr.bf16.mxu0 0
    %2827 = vmatpush1.bf16.msra.mxu0 %v2421
    %2828 = vmatprep.subr.bf16.mxu0 0
    %2829 = vmatpush1.bf16.msra.mxu0 %v2422
    %2830 = vmatprep.subr.bf16.mxu0 0
    %2831 = vmatpush1.bf16.msra.mxu0 %v2423
    %2832 = vmatprep.subr.bf16.mxu0 0
    %2833 = vmatpush1.bf16.msra.mxu0 %v2424
    %2834 = vmatprep.subr.bf16.mxu0 0
    %2835 = vmatpush1.bf16.msra.mxu0 %v2425
    %2836 = vmatprep.subr.bf16.mxu0 0
    %2837 = vmatpush1.bf16.msra.mxu0 %v2426
    %2838 = vmatprep.subr.bf16.mxu0 0
    %2839 = vmatpush1.bf16.msra.mxu0 %v2427
    %2840 = vmatprep.subr.bf16.mxu0 0
    %2841 = vmatpush1.bf16.msra.mxu0 %v2428
    %2842 = vmatprep.subr.bf16.mxu0 0
    %2843 = vmatpush1.bf16.msra.mxu0 %v2429
    %2844 = vmatprep.subr.bf16.mxu0 0
    %2845 = vmatpush1.bf16.msra.mxu0 %v2430
    %2846 = vmatprep.subr.bf16.mxu0 0
    %2847 = vmatpush1.bf16.msra.mxu0 %v2431
    %2848 = vmatprep.mubr.bf16.mxu0 %v1542
    %2849 = vmatmul.mubr.bf16.gmra.mrb[0].mxu0 %v1541
    %v2850 = vpop.f32.mrb[0].mxu0
    %v2851 = vadd.f32 %v2811, %v2850
    %v2852 = vpop.f32.mrb[0].mxu0
    %v2853 = vpop.f32.mrb[0].mxu0
    %v2854 = vpop.f32.mrb[0].mxu0
    %2855 = vdwg.mxu0
    %2856 = vmatprep.subr.bf16.mxu0 0
    %2857 = vmatpush1.bf16.msra.mxu0 %v2432
    %2858 = vmatprep.subr.bf16.mxu0 0
    %2859 = vmatpush1.bf16.msra.mxu0 %v2433
    %2860 = vmatprep.subr.bf16.mxu0 0
    %2861 = vmatpush1.bf16.msra.mxu0 %v2434
    %2862 = vmatprep.subr.bf16.mxu0 0
    %2863 = vmatpush1.bf16.msra.mxu0 %v2435
    %2864 = vmatprep.subr.bf16.mxu0 0
    %2865 = vmatpush1.bf16.msra.mxu0 %v2436
    %2866 = vmatprep.subr.bf16.mxu0 0
    %2867 = vmatpush1.bf16.msra.mxu0 %v2437
    %2868 = vmatprep.subr.bf16.mxu0 0
    %2869 = vmatpush1.bf16.msra.mxu0 %v2438
    %2870 = vmatprep.subr.bf16.mxu0 0
    %2871 = vmatpush1.bf16.msra.mxu0 %v2439
    %2872 = vmatprep.subr.bf16.mxu0 0
    %2873 = vmatpush1.bf16.msra.mxu0 %v2440
    %2874 = vmatprep.subr.bf16.mxu0 0
    %2875 = vmatpush1.bf16.msra.mxu0 %v2441
    %2876 = vmatprep.subr.bf16.mxu0 0
    %2877 = vmatpush1.bf16.msra.mxu0 %v2442
    %2878 = vmatprep.subr.bf16.mxu0 0
    %2879 = vmatpush1.bf16.msra.mxu0 %v2443
    %2880 = vmatprep.subr.bf16.mxu0 0
    %2881 = vmatpush1.bf16.msra.mxu0 %v2444
    %2882 = vmatprep.subr.bf16.mxu0 0
    %2883 = vmatpush1.bf16.msra.mxu0 %v2445
    %2884 = vmatprep.subr.bf16.mxu0 0
    %2885 = vmatpush1.bf16.msra.mxu0 %v2446
    %2886 = vmatprep.subr.bf16.mxu0 0
    %2887 = vmatpush1.bf16.msra.mxu0 %v2447
    %2888 = vmatprep.mubr.bf16.mxu0 %v1544
    %2889 = vmatmul.mubr.bf16.gmra.mrb[0].mxu0 %v1543
    %v2890 = vpop.f32.mrb[0].mxu0
    %v2891 = vadd.f32 %v2851, %v2890
    %v2892 = vpop.f32.mrb[0].mxu0
    %v2893 = vpop.f32.mrb[0].mxu0
    %v2894 = vpop.f32.mrb[0].mxu0
    %2895 = vdwg.mxu0
    %2896 = vst [vmem:[#allocation9] sm:$0x3] %v2891
    // Predicated region
    $region38: #{serialnet_forward.1} parent=1 // pred_check
      _
    $region39: #{serialnet_forward.1} parent=1 // pred_check_branch
      %2898 = sbr.rel (0) target = $region41
    $region40: #{serialnet_forward.1} parent=1 // pred_region
      %s2900 = ssub.s32 32, 32
      %2901 = vsyncadd [#allocation6], %s2900
      %s2903 = sshll.u32 [#allocation9], 4
      %s2904 = int_to_ptr.vmem [resolvable:$true] %s2903
      %2906 = dma.vmem_to_hbm [thread:$0]  %s2904, 32, %s7, [#allocation6]
    $region41: #{serialnet_forward.1} parent=1 // pred_fallthru
      _
    // Predicated region
    $region42: #{serialnet_forward.1} parent=1 // pred_check
      _
    $region43: #{serialnet_forward.1} parent=1 // pred_check_branch
      %2908 = sbr.rel (0) target = $region45
    $region44: #{serialnet_forward.1} parent=1 // pred_region
      %2909 = dma.done [#allocation6], 32
    $region45: #{serialnet_forward.1} parent=1 // pred_fallthru
      _
    %2910 = vsyncpa [#allocation5], 1
    %2911 = vsyncpa [#allocation8], 1
    %2912 = vsyncpa [#allocation6], 1

</llo_original>
